<compile_context>
chip_gen: v7x
topology: tpu7x:2x2x1
jax: 0.10.0
libtpu: 0.0.40
codegen_flags: <defaults>
</compile_context>

<pallas_src>
import functools

import jax
import jax.numpy as jnp
from jax.experimental import pallas as pl
from jax.experimental.pallas import tpu as pltpu


# ---------------------------------------------------------------------------
# Kernel
# ---------------------------------------------------------------------------
def _linear_attention_kernel(q_ref, k_ref, vaug_ref, o_ref, *, eps, approx_recip):
    """q_ref: (BG, L, D), k_ref: (BG, S, D), vaug_ref: (BG, S, D+1) = [V | 1]."""
    f32 = jnp.float32
    d = q_ref.shape[-1]

    # Feature map elu(x) + 1, computed in f32 (v5e VPU/EUP have no bf16 path).
    q = q_ref[...].astype(f32)
    k = k_ref[...].astype(f32)
    Q = jnp.where(q > 0, q + 1.0, jnp.exp(q))
    K = jnp.where(k > 0, k + 1.0, jnp.exp(k))

    # MXU operands keep the input dtype when it is bf16 (2x throughput on
    # v6e/v7x), otherwise f32; accumulation is always f32.
    mxu_dt = jnp.bfloat16 if q_ref.dtype == jnp.bfloat16 else f32
    Qm = Q.astype(mxu_dt)
    Km = K.astype(mxu_dt)
    Vm = vaug_ref[...].astype(mxu_dt)                      # (BG, S, D+1), [V | 1]

    # kv_aug[g, :, :D] = sum_s K[g,s,:]^T V[g,s,:]   (KV)
    # kv_aug[g, :,  D] = sum_s K[g,s,:]              (k_sum)  -- fused via ones col.
    # Contract the S axis directly; MXU consumes the transposed LHS natively,
    # so no in-kernel transpose is generated.
    kv_aug = jax.lax.dot_general(
        Km, Vm, (((1,), (1,)), ((0,), (0,))),
        preferred_element_type=f32)                        # (BG, D, D+1)

    # num_aug[g, :, :D] = Q @ KV ; num_aug[g, :, D] = Q . k_sum  (denominator).
    num_aug = jax.lax.dot_general(
        Qm, kv_aug.astype(mxu_dt), (((2,), (1,)), ((0,), (0,))),
        preferred_element_type=f32)                        # (BG, L, D+1)

    num = num_aug[..., :d]                                 # (BG, L, D)
    denom = num_aug[..., d:] + eps                         # (BG, L, 1)
    if approx_recip:
        z = pl.reciprocal(denom, approx=True)              # EUP slot, ~free
    else:
        z = 1.0 / denom                                    # exact (validation)

    # TODO(synk): for production shapes with tiny D a lane-dense (G, L*D) output
    # slab would turn masked vst.msk stores into full-width stores; needs
    # measurement since the in-kernel relayout may offset the win.
    o_ref[...] = (num * z).astype(o_ref.dtype)


# ---------------------------------------------------------------------------
# Block sizing helpers
# ---------------------------------------------------------------------------
def _round_up(x, m):
    return (x + m - 1) // m * m


def _slab_bytes(rows, cols, itemsize):
    # One per-(batch,head) 2-D slab padded to the (8, 128) VMEM/vreg tiling.
    return _round_up(max(int(rows), 1), 8) * _round_up(max(int(cols), 1), 128) * itemsize


def _per_g_vmem_bytes(L, S, D, in_itemsize, out_itemsize):
    # Double-buffered pipeline slabs: Q, K, [V|1] inputs + output.
    io = 2 * (_slab_bytes(L, D, in_itemsize)
              + _slab_bytes(S, D, in_itemsize)
              + _slab_bytes(S, D + 1, in_itemsize)
              + _slab_bytes(L, D, out_itemsize))
    # Generous allowance for f32 in-kernel intermediates (feature maps, casts,
    # kv_aug, num_aug, scaled output).
    scratch = 8 * _slab_bytes(max(L, S, D), D + 1, 4)
    return io + scratch


def _vmem_capacity_bytes():
    try:
        info = pltpu.get_tpu_info()
        for attr in ("vmem_capacity_bytes", "vmem_size_bytes", "vmem_bytes"):
            val = getattr(info, attr, None)
            if val:
                return int(val)
    except Exception:
        pass
    return 64 << 20  # conservative default: v7x per-TensorCore VMEM


def _choose_block_g(G, per_g_bytes, budget_bytes, target_steps=4,
                    min_block_bytes=1 << 20):
    """Largest BG whose slabs fit the VMEM budget; expose a few grid steps
    (pipelining + v7x megacore) only when per-step blocks stay large enough to
    amortize the ~0.35 us fixed grid overhead."""
    bg = max(1, min(int(G), int(budget_bytes // per_g_bytes)))
    if pl.cdiv(G, bg) < target_steps:
        bg_split = max(1, pl.cdiv(G, target_steps))
        if bg_split * per_g_bytes >= min_block_bytes:
            bg = bg_split
    return int(bg)


# ---------------------------------------------------------------------------
# Wrapper
# ---------------------------------------------------------------------------
def linear_attention(queries, keys, values, eps=1e-6, approx_reciprocal=False):
    """queries: (N, L, H, D), keys/values: (N, S, H, D) -> (N, L, H, D)."""
    N, L, H, D = queries.shape
    S = keys.shape[1]
    G = N * H
    out_dtype = queries.dtype

    # One head-major relayout per operand, done once by XLA outside the grid
    # loop; the ones-augmentation of V fuses into the same copy.
    # TODO(synk): with allow_input_fusion / a consumer accepting (N, H, L, D)
    # these HBM relayout passes could be removed entirely.
    q = jnp.transpose(queries, (0, 2, 1, 3)).reshape(G, L, D)
    k = jnp.transpose(keys, (0, 2, 1, 3)).reshape(G, S, D)
    v = jnp.transpose(values, (0, 2, 1, 3)).reshape(G, S, D)
    v_aug = jnp.concatenate([v, jnp.ones((G, S, 1), v.dtype)], axis=-1)  # (G,S,D+1)

    in_itemsize = queries.dtype.itemsize
    out_itemsize = jnp.zeros((), out_dtype).dtype.itemsize
    per_g = _per_g_vmem_bytes(L, S, D, in_itemsize, out_itemsize)

    vmem_cap = _vmem_capacity_bytes()
    vmem_limit = min(int(vmem_cap * 3 // 4), vmem_cap - (8 << 20))
    budget = vmem_limit // 2  # headroom for compiler scratch / spills

    bg = _choose_block_g(G, per_g, budget)

    G_pad = G
    if G % bg:
        divisors = [d_ for d_ in range(1, bg + 1) if G % d_ == 0]
        best_div = divisors[-1]
        if 2 * best_div >= bg:
            bg = best_div                     # close-enough divisor: keep blocks full
        else:
            G_pad = _round_up(G, bg)          # prime-ish G: zero-pad, avoid bg->1 cliff
            pad = G_pad - G
            padding = ((0, pad), (0, 0), (0, 0))
            q = jnp.pad(q, padding)
            k = jnp.pad(k, padding)
            v_aug = jnp.pad(v_aug, padding)

    grid = (G_pad // bg,)

    kernel = functools.partial(_linear_attention_kernel, eps=float(eps),
                               approx_recip=approx_reciprocal)

    out = pl.pallas_call(
        kernel,
        out_shape=jax.ShapeDtypeStruct((G_pad, L, D), out_dtype),
        grid_spec=pltpu.PrefetchScalarGridSpec(
            num_scalar_prefetch=0,
            grid=grid,
            in_specs=[
                pl.BlockSpec((bg, L, D), lambda g: (g, 0, 0)),       # queries
                pl.BlockSpec((bg, S, D), lambda g: (g, 0, 0)),       # keys
                pl.BlockSpec((bg, S, D + 1), lambda g: (g, 0, 0)),   # [values | 1]
            ],
            out_specs=pl.BlockSpec((bg, L, D), lambda g: (g, 0, 0)),
        ),
        compiler_params=pltpu.CompilerParams(
            dimension_semantics=("parallel",),
            vmem_limit_bytes=int(vmem_limit),
        ),
    )(q, k, v_aug)

    out = out[:G]
    # (G, L, D) -> (N, H, L, D) -> (N, L, H, D)
    return jnp.transpose(out.reshape(N, H, L, D), (0, 2, 1, 3))


# ---------------------------------------------------------------------------
# Pure-JAX reference mirroring the PyTorch module
# ---------------------------------------------------------------------------
def linear_attention_ref(queries, keys, values, eps=1e-6):
    Q = jax.nn.elu(queries) + 1.0
    K = jax.nn.elu(keys) + 1.0
    v_length = values.shape[1]
    vals = values / v_length
    KV = jnp.einsum('nshd,nshv->nhdv', K, vals)
    Z = 1.0 / (jnp.einsum('nlhd,nhd->nlh', Q, K.sum(axis=1)) + eps)
    return jnp.einsum('nlhd,nhdv,nlh->nlhv', Q, KV, Z) * v_length


if __name__ == "__main__":
    N, L, S, H, D = 2, 16, 16, 4, 16

    key = jax.random.PRNGKey(0)
    kq, kk, kv = jax.random.split(key, 3)
    queries = jax.random.normal(kq, (N, L, H, D), jnp.float32)
    keys = jax.random.normal(kk, (N, S, H, D), jnp.float32)
    values = jax.random.normal(kv, (N, S, H, D), jnp.float32)

    ref = linear_attention_ref(queries, keys, values)

    # 1) f32 inputs, exact reciprocal (validation build).
    out = jax.block_until_ready(linear_attention(queries, keys, values))
    assert out.shape == (N, L, H, D) and out.dtype == jnp.float32
    assert jnp.allclose(out, ref, atol=1e-4, rtol=1e-4), "f32 exact mismatch"

    # 2) f32 inputs, EUP approximate reciprocal (production normalizer path).
    out_a = jax.block_until_ready(
        linear_attention(queries, keys, values, approx_reciprocal=True))
    assert jnp.allclose(out_a, ref, atol=1e-2, rtol=1e-2), "f32 approx mismatch"

    # 3) bf16 inputs: dtype-faithful bf16 output, bf16 MXU operands.
    q16, k16, v16 = (x.astype(jnp.bfloat16) for x in (queries, keys, values))
    out16 = jax.block_until_ready(linear_attention(q16, k16, v16))
    assert out16.dtype == jnp.bfloat16
    ref16 = linear_attention_ref(q16.astype(jnp.float32),
                                 k16.astype(jnp.float32),
                                 v16.astype(jnp.float32))
    assert jnp.allclose(out16.astype(jnp.float32), ref16, atol=7e-2, rtol=7e-2), \
        "bf16 mismatch"

    # TODO(synk): optional q_mask [N, L] / kv_mask [N, S] (None in this config)
    # are not implemented; they would be elementwise multiplies on Q / K,[V|1]
    # before the S-contraction.
    print("KERNEL_OK")
</pallas_src>

<mosaic_0001>
module attributes {stable_mosaic.version = 11 : i64} {
  func.func @_linear_attention_kernel(%arg0: i32, %arg1: memref<8x16x16xf32, #tpu.memory_space<vmem>>, %arg2: memref<8x16x16xf32, #tpu.memory_space<vmem>>, %arg3: memref<8x16x17xf32, #tpu.memory_space<vmem>>, %arg4: memref<8x16x16xf32, #tpu.memory_space<vmem>>) attributes {dimension_semantics = [#tpu.dimension_semantics<parallel>], iteration_bounds = array<i64: 1>, scalar_prefetch = 0 : i64, scratch_operands = 0 : i64, tpu.core_type = #tpu.core_type<tc>, window_params = [{transform_indices = @transform_0, window_bounds = array<i64: 8, 16, 16>}, {transform_indices = @transform_1, window_bounds = array<i64: 8, 16, 16>}, {transform_indices = @transform_2, window_bounds = array<i64: 8, 16, 17>}, {transform_indices = @transform_3, window_bounds = array<i64: 8, 16, 16>}]} {
    %c0 = arith.constant 0 : index
    %c0_0 = arith.constant 0 : index
    %c0_1 = arith.constant 0 : index
    %0 = vector.load %arg1[%c0, %c0_0, %c0_1] : memref<8x16x16xf32, #tpu.memory_space<vmem>>, vector<8x16x16xf32>
    %c0_2 = arith.constant 0 : index
    %c0_3 = arith.constant 0 : index
    %c0_4 = arith.constant 0 : index
    %1 = vector.load %arg2[%c0_2, %c0_3, %c0_4] : memref<8x16x16xf32, #tpu.memory_space<vmem>>, vector<8x16x16xf32>
    %cst = arith.constant 0.000000e+00 : f32
    %2 = vector.broadcast %cst : f32 to vector<8x16x16xf32>
    %3 = arith.cmpf ogt, %0, %2 : vector<8x16x16xf32>
    %cst_5 = arith.constant 1.000000e+00 : f32
    %4 = vector.broadcast %cst_5 : f32 to vector<8x16x16xf32>
    %5 = arith.addf %0, %4 : vector<8x16x16xf32>
    %6 = math.exp %0 : vector<8x16x16xf32>
    %7 = arith.select %3, %5, %6 : vector<8x16x16xi1>, vector<8x16x16xf32>
    %cst_6 = arith.constant 0.000000e+00 : f32
    %8 = vector.broadcast %cst_6 : f32 to vector<8x16x16xf32>
    %9 = arith.cmpf ogt, %1, %8 : vector<8x16x16xf32>
    %cst_7 = arith.constant 1.000000e+00 : f32
    %10 = vector.broadcast %cst_7 : f32 to vector<8x16x16xf32>
    %11 = arith.addf %1, %10 : vector<8x16x16xf32>
    %12 = math.exp %1 : vector<8x16x16xf32>
    %13 = arith.select %9, %11, %12 : vector<8x16x16xi1>, vector<8x16x16xf32>
    %c0_8 = arith.constant 0 : index
    %c0_9 = arith.constant 0 : index
    %c0_10 = arith.constant 0 : index
    %14 = vector.load %arg3[%c0_8, %c0_9, %c0_10] : memref<8x16x17xf32, #tpu.memory_space<vmem>>, vector<8x16x17xf32>
    %cst_11 = arith.constant dense<0.000000e+00> : vector<8x16x17xf32>
    %15 = tpu.matmul %13, %14, %cst_11 {dimension_numbers = #tpu.dot_dimension_numbers<[1], [1], [2], [2], [0, 0, 0, 2, 1, 2], [0], [0]>} : vector<8x16x16xf32>, vector<8x16x17xf32>, vector<8x16x17xf32> -> vector<8x16x17xf32>
    %cst_12 = arith.constant dense<0.000000e+00> : vector<8x16x17xf32>
    %16 = tpu.matmul %7, %15, %cst_12 {dimension_numbers = #tpu.dot_dimension_numbers<[2], [1], [1], [2], [0, 0, 0, 1, 1, 2], [0], [0]>} : vector<8x16x16xf32>, vector<8x16x17xf32>, vector<8x16x17xf32> -> vector<8x16x17xf32>
    %17 = vector.extract_strided_slice %16 {offsets = [0, 0, 0], sizes = [8, 16, 16], strides = [1, 1, 1]} : vector<8x16x17xf32> to vector<8x16x16xf32>
    %18 = vector.extract_strided_slice %16 {offsets = [0, 0, 16], sizes = [8, 16, 1], strides = [1, 1, 1]} : vector<8x16x17xf32> to vector<8x16x1xf32>
    %cst_13 = arith.constant 9.99999997E-7 : f32
    %19 = vector.broadcast %cst_13 : f32 to vector<8x16x1xf32>
    %20 = arith.addf %18, %19 : vector<8x16x1xf32>
    %cst_14 = arith.constant 1.000000e+00 : f32
    %21 = vector.broadcast %cst_14 : f32 to vector<8x16x1xf32>
    %22 = arith.divf %21, %20 : vector<8x16x1xf32>
    %23 = vector.broadcast %22 : vector<8x16x1xf32> to vector<8x16x16xf32>
    %24 = arith.mulf %17, %23 : vector<8x16x16xf32>
    %c0_15 = arith.constant 0 : index
    %c0_16 = arith.constant 0 : index
    %c0_17 = arith.constant 0 : index
    %25 = vector.load %arg4[%c0_15, %c0_16, %c0_17] : memref<8x16x16xf32, #tpu.memory_space<vmem>>, vector<8x16x16xf32>
    tpu.vector_store %arg4[%c0_15, %c0_16, %c0_17], %24 {strides = array<i32>} : memref<8x16x16xf32, #tpu.memory_space<vmem>>, vector<8x16x16xf32>,
    return
  }
  func.func @transform_0(%arg0: i32) -> (i32, i32, i32) {
    %c0_i32 = arith.constant 0 : i32
    %c0_i32_0 = arith.constant 0 : i32
    %c0_i32_1 = arith.constant 0 : i32
    return %arg0, %c0_i32, %c0_i32_0 : i32, i32, i32
  }
  func.func @transform_1(%arg0: i32) -> (i32, i32, i32) {
    %c0_i32 = arith.constant 0 : i32
    %c0_i32_0 = arith.constant 0 : i32
    %c0_i32_1 = arith.constant 0 : i32
    return %arg0, %c0_i32, %c0_i32_0 : i32, i32, i32
  }
  func.func @transform_2(%arg0: i32) -> (i32, i32, i32) {
    %c0_i32 = arith.constant 0 : i32
    %c0_i32_0 = arith.constant 0 : i32
    %c0_i32_1 = arith.constant 0 : i32
    return %arg0, %c0_i32, %c0_i32_0 : i32, i32, i32
  }
  func.func @transform_3(%arg0: i32) -> (i32, i32, i32) {
    %c0_i32 = arith.constant 0 : i32
    %c0_i32_0 = arith.constant 0 : i32
    %c0_i32_1 = arith.constant 0 : i32
    return %arg0, %c0_i32, %c0_i32_0 : i32, i32, i32
  }
}

</mosaic_0001>

<llo_original>
// kernel: tpu_custom_call.1
$region0: #{tpu_custom_call.1}
  #allocation0 [shape = 'u32[]', space=smem, size = 0x4, offset = 0x4, fixed_abs, tag = 'smem constant byte address 0x4 - core index']
  #allocation1 [shape = 'u32[144,128]{1,0:T(1,128)}', space=vmem, size = 0x12000, scoped, tag = 'internal scratch']
  %s0 = inlined_call_operand.hbm [shape: f32[8,16,16], index: 0, kind: input, shape index: {}]
  %s1 = inlined_call_operand.hbm [shape: f32[8,16,16], index: 1, kind: input, shape index: {}]
  %s2 = inlined_call_operand.hbm [shape: f32[8,16,17], index: 2, kind: input, shape index: {}]
  %s3 = inlined_call_operand.hbm [shape: f32[8,16,16], index: 3, kind: output, shape index: {}]
  %s4 = sld [smem:[#allocation0]]
  $region34: #{tpu_custom_call.1} parent=0
    _
  %s6 = ssub.s32 1, %s4
  %s7 = scalar_select 0, %s6, %s4
  $region1: #{tpu_custom_call.1} parent=0
    #allocation2 [shape = 'u8[65536]{0}', space=vmem, size = 0x10000, scoped, tag = 'input window, operand 0, single buffered']
    #allocation3 [shape = 's32[1]{0}', space=sflag, size = 0x4, scoped, tag = 'scoped memory for tpu_custom_call.1']
    #allocation4 [shape = 's32[1]{0}', space=sflag, size = 0x4, scoped, tag = 'scoped memory for tpu_custom_call.1']
    #allocation5 [shape = 'u8[65536]{0}', space=vmem, size = 0x10000, scoped, tag = 'input window, operand 1, single buffered']
    #allocation6 [shape = 's32[1]{0}', space=sflag, size = 0x4, scoped, tag = 'scoped memory for tpu_custom_call.1']
    #allocation7 [shape = 'u8[65536]{0}', space=vmem, size = 0x10000, scoped, tag = 'input window, operand 2, single buffered']
    #allocation8 [shape = 'u8[65536]{0}', space=vmem, size = 0x10000, scoped, tag = 'output window, operand 0, single buffered']
    %8 = vsyncpa [#allocation3], 0
    %9 = vsyncpa [#allocation6], 0
    %10 = vsyncpa [#allocation4], 0
    // Predicated region
    $region2: #{tpu_custom_call.1} parent=1 // pred_check
      _
    $region3: #{tpu_custom_call.1} parent=1 // pred_check_branch
      %12 = sbr.rel (0) target = $region5
    $region4: #{tpu_custom_call.1} parent=1 // pred_region
      %s14 = ssub.s32 2048, 2048
      %15 = vsyncadd [#allocation3], %s14
      %s16 = sshll.u32 [#allocation2], 4
      %s17 = int_to_ptr.vmem [resolvable:$true] %s16
      %22 = dma.hbm_to_vmem [thread:$0]  %s0, 2048, %s17, [#allocation3], 128, 128, 8
    $region5: #{tpu_custom_call.1} parent=1 // pred_fallthru
      _
    // Predicated region
    $region6: #{tpu_custom_call.1} parent=1 // pred_check
      _
    $region7: #{tpu_custom_call.1} parent=1 // pred_check_branch
      %24 = sbr.rel (0) target = $region9
    $region8: #{tpu_custom_call.1} parent=1 // pred_region
      %s26 = ssub.s32 2048, 2048
      %27 = vsyncadd [#allocation6], %s26
      %s28 = sshll.u32 [#allocation5], 4
      %s29 = int_to_ptr.vmem [resolvable:$true] %s28
      %34 = dma.hbm_to_vmem [thread:$0]  %s1, 2048, %s29, [#allocation6], 128, 128, 8
    $region9: #{tpu_custom_call.1} parent=1 // pred_fallthru
      _
    // Predicated region
    $region10: #{tpu_custom_call.1} parent=1 // pred_check
      _
    $region11: #{tpu_custom_call.1} parent=1 // pred_check_branch
      %36 = sbr.rel (0) target = $region13
    $region12: #{tpu_custom_call.1} parent=1 // pred_region
      %s38 = ssub.s32 2048, 2048
      %39 = vsyncadd [#allocation6], %s38
      %s40 = sshll.u32 [#allocation7], 4
      %s41 = int_to_ptr.vmem [resolvable:$true] %s40
      %46 = dma.hbm_to_vmem [thread:$0]  %s2, 2048, %s41, [#allocation6], 128, 128, 8
    $region13: #{tpu_custom_call.1} parent=1 // pred_fallthru
      _
    // Predicated region
    $region14: #{tpu_custom_call.1} parent=1 // pred_check
      _
    $region15: #{tpu_custom_call.1} parent=1 // pred_check_branch
      %48 = sbr.rel (0) target = $region17
    $region16: #{tpu_custom_call.1} parent=1 // pred_region
      %49 = dma.done [#allocation3], 2048
    $region17: #{tpu_custom_call.1} parent=1 // pred_fallthru
      _
    // Predicated region
    $region18: #{tpu_custom_call.1} parent=1 // pred_check
      _
    $region19: #{tpu_custom_call.1} parent=1 // pred_check_branch
      %51 = sbr.rel (0) target = $region21
    $region20: #{tpu_custom_call.1} parent=1 // pred_region
      %52 = dma.done [#allocation6], 2048
    $region21: #{tpu_custom_call.1} parent=1 // pred_fallthru
      _
    // Predicated region
    $region22: #{tpu_custom_call.1} parent=1 // pred_check
      _
    $region23: #{tpu_custom_call.1} parent=1 // pred_check_branch
      %54 = sbr.rel (0) target = $region25
    $region24: #{tpu_custom_call.1} parent=1 // pred_region
      %55 = dma.done [#allocation6], 2048
    $region25: #{tpu_custom_call.1} parent=1 // pred_fallthru
      _
    %v56 = vld [vmem:[#allocation2] sm:$0xff]
    %v57 = vld [vmem:[#allocation2 + $0x8] sm:$0xff]
    %v58 = vld [vmem:[#allocation2 + $0x10] sm:$0xff]
    %v59 = vld [vmem:[#allocation2 + $0x18] sm:$0xff]
    %v60 = vld [vmem:[#allocation2 + $0x20] sm:$0xff]
    %v61 = vld [vmem:[#allocation2 + $0x28] sm:$0xff]
    %v62 = vld [vmem:[#allocation2 + $0x30] sm:$0xff]
    %v63 = vld [vmem:[#allocation2 + $0x38] sm:$0xff]
    %v64 = vld [vmem:[#allocation2 + $0x40] sm:$0xff]
    %v65 = vld [vmem:[#allocation2 + $0x48] sm:$0xff]
    %v66 = vld [vmem:[#allocation2 + $0x50] sm:$0xff]
    %v67 = vld [vmem:[#allocation2 + $0x58] sm:$0xff]
    %v68 = vld [vmem:[#allocation2 + $0x60] sm:$0xff]
    %v69 = vld [vmem:[#allocation2 + $0x68] sm:$0xff]
    %v70 = vld [vmem:[#allocation2 + $0x70] sm:$0xff]
    %v71 = vld [vmem:[#allocation2 + $0x78] sm:$0xff]
    %v72 = vld [vmem:[#allocation5] sm:$0xff]
    %v73 = vld [vmem:[#allocation5 + $0x8] sm:$0xff]
    %v74 = vld [vmem:[#allocation5 + $0x10] sm:$0xff]
    %v75 = vld [vmem:[#allocation5 + $0x18] sm:$0xff]
    %v76 = vld [vmem:[#allocation5 + $0x20] sm:$0xff]
    %v77 = vld [vmem:[#allocation5 + $0x28] sm:$0xff]
    %v78 = vld [vmem:[#allocation5 + $0x30] sm:$0xff]
    %v79 = vld [vmem:[#allocation5 + $0x38] sm:$0xff]
    %v80 = vld [vmem:[#allocation5 + $0x40] sm:$0xff]
    %v81 = vld [vmem:[#allocation5 + $0x48] sm:$0xff]
    %v82 = vld [vmem:[#allocation5 + $0x50] sm:$0xff]
    %v83 = vld [vmem:[#allocation5 + $0x58] sm:$0xff]
    %v84 = vld [vmem:[#allocation5 + $0x60] sm:$0xff]
    %v85 = vld [vmem:[#allocation5 + $0x68] sm:$0xff]
    %v86 = vld [vmem:[#allocation5 + $0x70] sm:$0xff]
    %v87 = vld [vmem:[#allocation5 + $0x78] sm:$0xff]
    %vm88 = vcmp.gt.f32.partialorder %v56, 0.0
    %vm89 = vcmp.gt.f32.partialorder %v57, 0.0
    %vm90 = vcmp.gt.f32.partialorder %v58, 0.0
    %vm91 = vcmp.gt.f32.partialorder %v59, 0.0
    %vm92 = vcmp.gt.f32.partialorder %v60, 0.0
    %vm93 = vcmp.gt.f32.partialorder %v61, 0.0
    %vm94 = vcmp.gt.f32.partialorder %v62, 0.0
    %vm95 = vcmp.gt.f32.partialorder %v63, 0.0
    %vm96 = vcmp.gt.f32.partialorder %v64, 0.0
    %vm97 = vcmp.gt.f32.partialorder %v65, 0.0
    %vm98 = vcmp.gt.f32.partialorder %v66, 0.0
    %vm99 = vcmp.gt.f32.partialorder %v67, 0.0
    %vm100 = vcmp.gt.f32.partialorder %v68, 0.0
    %vm101 = vcmp.gt.f32.partialorder %v69, 0.0
    %vm102 = vcmp.gt.f32.partialorder %v70, 0.0
    %vm103 = vcmp.gt.f32.partialorder %v71, 0.0
    %v104 = vadd.f32 %v56, 1.0
    %v105 = vadd.f32 %v57, 1.0
    %v106 = vadd.f32 %v58, 1.0
    %v107 = vadd.f32 %v59, 1.0
    %v108 = vadd.f32 %v60, 1.0
    %v109 = vadd.f32 %v61, 1.0
    %v110 = vadd.f32 %v62, 1.0
    %v111 = vadd.f32 %v63, 1.0
    %v112 = vadd.f32 %v64, 1.0
    %v113 = vadd.f32 %v65, 1.0
    %v114 = vadd.f32 %v66, 1.0
    %v115 = vadd.f32 %v67, 1.0
    %v116 = vadd.f32 %v68, 1.0
    %v117 = vadd.f32 %v69, 1.0
    %v118 = vadd.f32 %v70, 1.0
    %v119 = vadd.f32 %v71, 1.0
    %v120 = vmul.f32 %v56, 1.442695
    %v121 = vpow.pop %v120
    %v122 = vmul.f32 %v57, 1.442695
    %v123 = vpow.pop %v122
    %v124 = vmul.f32 %v58, 1.442695
    %v125 = vpow.pop %v124
    %v126 = vmul.f32 %v59, 1.442695
    %v127 = vpow.pop %v126
    %v128 = vmul.f32 %v60, 1.442695
    %v129 = vpow.pop %v128
    %v130 = vmul.f32 %v61, 1.442695
    %v131 = vpow.pop %v130
    %v132 = vmul.f32 %v62, 1.442695
    %v133 = vpow.pop %v132
    %v134 = vmul.f32 %v63, 1.442695
    %v135 = vpow.pop %v134
    %v136 = vmul.f32 %v64, 1.442695
    %v137 = vpow.pop %v136
    %v138 = vmul.f32 %v65, 1.442695
    %v139 = vpow.pop %v138
    %v140 = vmul.f32 %v66, 1.442695
    %v141 = vpow.pop %v140
    %v142 = vmul.f32 %v67, 1.442695
    %v143 = vpow.pop %v142
    %v144 = vmul.f32 %v68, 1.442695
    %v145 = vpow.pop %v144
    %v146 = vmul.f32 %v69, 1.442695
    %v147 = vpow.pop %v146
    %v148 = vmul.f32 %v70, 1.442695
    %v149 = vpow.pop %v148
    %v150 = vmul.f32 %v71, 1.442695
    %v151 = vpow.pop %v150
    %v152 = vsel %vm88, %v104, %v121
    %v153 = vsel %vm89, %v105, %v123
    %v154 = vsel %vm90, %v106, %v125
    %v155 = vsel %vm91, %v107, %v127
    %v156 = vsel %vm92, %v108, %v129
    %v157 = vsel %vm93, %v109, %v131
    %v158 = vsel %vm94, %v110, %v133
    %v159 = vsel %vm95, %v111, %v135
    %v160 = vsel %vm96, %v112, %v137
    %v161 = vsel %vm97, %v113, %v139
    %v162 = vsel %vm98, %v114, %v141
    %v163 = vsel %vm99, %v115, %v143
    %v164 = vsel %vm100, %v116, %v145
    %v165 = vsel %vm101, %v117, %v147
    %v166 = vsel %vm102, %v118, %v149
    %v167 = vsel %vm103, %v119, %v151
    %vm168 = vcmp.gt.f32.partialorder %v72, 0.0
    %vm169 = vcmp.gt.f32.partialorder %v73, 0.0
    %vm170 = vcmp.gt.f32.partialorder %v74, 0.0
    %vm171 = vcmp.gt.f32.partialorder %v75, 0.0
    %vm172 = vcmp.gt.f32.partialorder %v76, 0.0
    %vm173 = vcmp.gt.f32.partialorder %v77, 0.0
    %vm174 = vcmp.gt.f32.partialorder %v78, 0.0
    %vm175 = vcmp.gt.f32.partialorder %v79, 0.0
    %vm176 = vcmp.gt.f32.partialorder %v80, 0.0
    %vm177 = vcmp.gt.f32.partialorder %v81, 0.0
    %vm178 = vcmp.gt.f32.partialorder %v82, 0.0
    %vm179 = vcmp.gt.f32.partialorder %v83, 0.0
    %vm180 = vcmp.gt.f32.partialorder %v84, 0.0
    %vm181 = vcmp.gt.f32.partialorder %v85, 0.0
    %vm182 = vcmp.gt.f32.partialorder %v86, 0.0
    %vm183 = vcmp.gt.f32.partialorder %v87, 0.0
    %v184 = vadd.f32 %v72, 1.0
    %v185 = vadd.f32 %v73, 1.0
    %v186 = vadd.f32 %v74, 1.0
    %v187 = vadd.f32 %v75, 1.0
    %v188 = vadd.f32 %v76, 1.0
    %v189 = vadd.f32 %v77, 1.0
    %v190 = vadd.f32 %v78, 1.0
    %v191 = vadd.f32 %v79, 1.0
    %v192 = vadd.f32 %v80, 1.0
    %v193 = vadd.f32 %v81, 1.0
    %v194 = vadd.f32 %v82, 1.0
    %v195 = vadd.f32 %v83, 1.0
    %v196 = vadd.f32 %v84, 1.0
    %v197 = vadd.f32 %v85, 1.0
    %v198 = vadd.f32 %v86, 1.0
    %v199 = vadd.f32 %v87, 1.0
    %v200 = vmul.f32 %v72, 1.442695
    %v201 = vpow.pop %v200
    %v202 = vmul.f32 %v73, 1.442695
    %v203 = vpow.pop %v202
    %v204 = vmul.f32 %v74, 1.442695
    %v205 = vpow.pop %v204
    %v206 = vmul.f32 %v75, 1.442695
    %v207 = vpow.pop %v206
    %v208 = vmul.f32 %v76, 1.442695
    %v209 = vpow.pop %v208
    %v210 = vmul.f32 %v77, 1.442695
    %v211 = vpow.pop %v210
    %v212 = vmul.f32 %v78, 1.442695
    %v213 = vpow.pop %v212
    %v214 = vmul.f32 %v79, 1.442695
    %v215 = vpow.pop %v214
    %v216 = vmul.f32 %v80, 1.442695
    %v217 = vpow.pop %v216
    %v218 = vmul.f32 %v81, 1.442695
    %v219 = vpow.pop %v218
    %v220 = vmul.f32 %v82, 1.442695
    %v221 = vpow.pop %v220
    %v222 = vmul.f32 %v83, 1.442695
    %v223 = vpow.pop %v222
    %v224 = vmul.f32 %v84, 1.442695
    %v225 = vpow.pop %v224
    %v226 = vmul.f32 %v85, 1.442695
    %v227 = vpow.pop %v226
    %v228 = vmul.f32 %v86, 1.442695
    %v229 = vpow.pop %v228
    %v230 = vmul.f32 %v87, 1.442695
    %v231 = vpow.pop %v230
    %v232 = vsel %vm168, %v184, %v201
    %v233 = vsel %vm169, %v185, %v203
    %v234 = vsel %vm170, %v186, %v205
    %v235 = vsel %vm171, %v187, %v207
    %v236 = vsel %vm172, %v188, %v209
    %v237 = vsel %vm173, %v189, %v211
    %v238 = vsel %vm174, %v190, %v213
    %v239 = vsel %vm175, %v191, %v215
    %v240 = vsel %vm176, %v192, %v217
    %v241 = vsel %vm177, %v193, %v219
    %v242 = vsel %vm178, %v194, %v221
    %v243 = vsel %vm179, %v195, %v223
    %v244 = vsel %vm180, %v196, %v225
    %v245 = vsel %vm181, %v197, %v227
    %v246 = vsel %vm182, %v198, %v229
    %v247 = vsel %vm183, %v199, %v231
    %v248 = vld [vmem:[#allocation7] sm:$0xff]
    %v249 = vld [vmem:[#allocation7 + $0x8] sm:$0xff]
    %v250 = vld [vmem:[#allocation7 + $0x10] sm:$0xff]
    %v251 = vld [vmem:[#allocation7 + $0x18] sm:$0xff]
    %v252 = vld [vmem:[#allocation7 + $0x20] sm:$0xff]
    %v253 = vld [vmem:[#allocation7 + $0x28] sm:$0xff]
    %v254 = vld [vmem:[#allocation7 + $0x30] sm:$0xff]
    %v255 = vld [vmem:[#allocation7 + $0x38] sm:$0xff]
    %v256 = vld [vmem:[#allocation7 + $0x40] sm:$0xff]
    %v257 = vld [vmem:[#allocation7 + $0x48] sm:$0xff]
    %v258 = vld [vmem:[#allocation7 + $0x50] sm:$0xff]
    %v259 = vld [vmem:[#allocation7 + $0x58] sm:$0xff]
    %v260 = vld [vmem:[#allocation7 + $0x60] sm:$0xff]
    %v261 = vld [vmem:[#allocation7 + $0x68] sm:$0xff]
    %v262 = vld [vmem:[#allocation7 + $0x70] sm:$0xff]
    %v263 = vld [vmem:[#allocation7 + $0x78] sm:$0xff]
    %264 = vxpose.xlu0.b32.start [1/16] %v232, 128
    %265 = vxpose.xlu0.b32.cont [2/16] %v233, 128
    %266 = vxpose.xlu0.b32.cont [3/16] 0.0, 128
    %267 = vxpose.xlu0.b32.cont [4/16] 0.0, 128
    %268 = vxpose.xlu0.b32.cont [5/16] 0.0, 128
    %269 = vxpose.xlu0.b32.cont [6/16] 0.0, 128
    %270 = vxpose.xlu0.b32.cont [7/16] 0.0, 128
    %271 = vxpose.xlu0.b32.cont [8/16] 0.0, 128
    %272 = vxpose.xlu0.b32.cont [9/16] 0.0, 128
    %273 = vxpose.xlu0.b32.cont [10/16] 0.0, 128
    %274 = vxpose.xlu0.b32.cont [11/16] 0.0, 128
    %275 = vxpose.xlu0.b32.cont [12/16] 0.0, 128
    %276 = vxpose.xlu0.b32.cont [13/16] 0.0, 128
    %277 = vxpose.xlu0.b32.cont [14/16] 0.0, 128
    %278 = vxpose.xlu0.b32.cont [15/16] 0.0, 128
    %279 = vxpose.xlu0.b32.end [16/16] 0.0, 128
    %v280 = vpop.trf.xlu0
    %v281 = vpop.trf.xlu0
    %v282 = vpop.trf.xlu0
    %v283 = vpop.trf.xlu0
    %v284 = vpop.trf.xlu0
    %v285 = vpop.trf.xlu0
    %v286 = vpop.trf.xlu0
    %v287 = vpop.trf.xlu0
    %v288 = vpop.trf.xlu0
    %v289 = vpop.trf.xlu0
    %v290 = vpop.trf.xlu0
    %v291 = vpop.trf.xlu0
    %v292 = vpop.trf.xlu0
    %v293 = vpop.trf.xlu0
    %v294 = vpop.trf.xlu0
    %v295 = vpop.trf.xlu0
    %vm296 = vcmask 130048
    %v298 = vsel %vm296, %v280, 0
    %v301 = vsel %vm296, %v281, 0
    %303 = vmatprep.subr.mxu0 0.0
    %304 = vmatpush1.msra.mxu0 %v248
    %305 = vmatprep.subr.mxu0 0.0
    %306 = vmatpush1.msra.mxu0 %v249
    %307 = vmatprep.subr.mxu0 0.0
    %308 = vmatpush1.msra.mxu0 0.0
    %309 = vmatprep.subr.mxu0 0.0
    %310 = vmatpush1.msra.mxu0 0.0
    %311 = vmatprep.subr.mxu0 0.0
    %312 = vmatpush1.msra.mxu0 0.0
    %313 = vmatprep.subr.mxu0 0.0
    %314 = vmatpush1.msra.mxu0 0.0
    %315 = vmatprep.subr.mxu0 0.0
    %316 = vmatpush1.msra.mxu0 0.0
    %317 = vmatprep.subr.mxu0 0.0
    %318 = vmatpush1.msra.mxu0 0.0
    %319 = vmatprep.subr.mxu0 0.0
    %320 = vmatpush1.msra.mxu0 0.0
    %321 = vmatprep.subr.mxu0 0.0
    %322 = vmatpush1.msra.mxu0 0.0
    %323 = vmatprep.subr.mxu0 0.0
    %324 = vmatpush1.msra.mxu0 0.0
    %325 = vmatprep.subr.mxu0 0.0
    %326 = vmatpush1.msra.mxu0 0.0
    %327 = vmatprep.subr.mxu0 0.0
    %328 = vmatpush1.msra.mxu0 0.0
    %329 = vmatprep.subr.mxu0 0.0
    %330 = vmatpush1.msra.mxu0 0.0
    %331 = vmatprep.subr.mxu0 0.0
    %332 = vmatpush1.msra.mxu0 0.0
    %333 = vmatprep.subr.mxu0 0.0
    %334 = vmatpush1.msra.mxu0 0.0
    %335 = vmatprep.subr.mxu0 0.0
    %336 = vmatpush1.msra.mxu0 0.0
    %337 = vmatprep.subr.mxu0 0.0
    %338 = vmatpush1.msra.mxu0 0.0
    %339 = vmatprep.subr.mxu0 0.0
    %340 = vmatpush1.msra.mxu0 0.0
    %341 = vmatprep.subr.mxu0 0.0
    %342 = vmatpush1.msra.mxu0 0.0
    %343 = vmatprep.subr.mxu0 0.0
    %344 = vmatpush1.msra.mxu0 0.0
    %345 = vmatprep.subr.mxu0 0.0
    %346 = vmatpush1.msra.mxu0 0.0
    %347 = vmatprep.subr.mxu0 0.0
    %348 = vmatpush1.msra.mxu0 0.0
    %349 = vmatprep.subr.mxu0 0.0
    %350 = vmatpush1.msra.mxu0 0.0
    %351 = vmatprep.subr.mxu0 0.0
    %352 = vmatpush1.msra.mxu0 0.0
    %353 = vmatprep.subr.mxu0 0.0
    %354 = vmatpush1.msra.mxu0 0.0
    %355 = vmatprep.subr.mxu0 0.0
    %356 = vmatpush1.msra.mxu0 0.0
    %357 = vmatprep.subr.mxu0 0.0
    %358 = vmatpush1.msra.mxu0 0.0
    %359 = vmatprep.subr.mxu0 0.0
    %360 = vmatpush1.msra.mxu0 0.0
    %361 = vmatprep.subr.mxu0 0.0
    %362 = vmatpush1.msra.mxu0 0.0
    %363 = vmatprep.subr.mxu0 0.0
    %364 = vmatpush1.msra.mxu0 0.0
    %365 = vmatprep.subr.mxu0 0.0
    %366 = vmatpush1.msra.mxu0 0.0
    %367 = vmatprep.mubr.f32.mxu0 0.0
    %368 = vmatmul.mubr.f32.gmra.mrb[0].mxu0 %v298
    %v369 = vpop.f32.mrb[0].mxu0
    %v370 = vadd.f32 0.0, %v369
    %v371 = vpop.f32.mrb[0].mxu0
    %372 = vmatprep.mubr.f32.mxu0 0.0
    %373 = vmatmul.mubr.f32.gmra.mrb[0].mxu0 %v301
    %v374 = vpop.f32.mrb[0].mxu0
    %v375 = vadd.f32 0.0, %v374
    %v376 = vpop.f32.mrb[0].mxu0
    %377 = vdwg.mxu0
    %378 = vxpose.xlu0.b32.start [1/16] %v234, 128
    %379 = vxpose.xlu0.b32.cont [2/16] %v235, 128
    %380 = vxpose.xlu0.b32.cont [3/16] 0.0, 128
    %381 = vxpose.xlu0.b32.cont [4/16] 0.0, 128
    %382 = vxpose.xlu0.b32.cont [5/16] 0.0, 128
    %383 = vxpose.xlu0.b32.cont [6/16] 0.0, 128
    %384 = vxpose.xlu0.b32.cont [7/16] 0.0, 128
    %385 = vxpose.xlu0.b32.cont [8/16] 0.0, 128
    %386 = vxpose.xlu0.b32.cont [9/16] 0.0, 128
    %387 = vxpose.xlu0.b32.cont [10/16] 0.0, 128
    %388 = vxpose.xlu0.b32.cont [11/16] 0.0, 128
    %389 = vxpose.xlu0.b32.cont [12/16] 0.0, 128
    %390 = vxpose.xlu0.b32.cont [13/16] 0.0, 128
    %391 = vxpose.xlu0.b32.cont [14/16] 0.0, 128
    %392 = vxpose.xlu0.b32.cont [15/16] 0.0, 128
    %393 = vxpose.xlu0.b32.end [16/16] 0.0, 128
    %v394 = vpop.trf.xlu0
    %v395 = vpop.trf.xlu0
    %v396 = vpop.trf.xlu0
    %v397 = vpop.trf.xlu0
    %v398 = vpop.trf.xlu0
    %v399 = vpop.trf.xlu0
    %v400 = vpop.trf.xlu0
    %v401 = vpop.trf.xlu0
    %v402 = vpop.trf.xlu0
    %v403 = vpop.trf.xlu0
    %v404 = vpop.trf.xlu0
    %v405 = vpop.trf.xlu0
    %v406 = vpop.trf.xlu0
    %v407 = vpop.trf.xlu0
    %v408 = vpop.trf.xlu0
    %v409 = vpop.trf.xlu0
    %v411 = vsel %vm296, %v394, 0
    %v414 = vsel %vm296, %v395, 0
    %416 = vmatprep.subr.mxu0 0.0
    %417 = vmatpush1.msra.mxu0 %v250
    %418 = vmatprep.subr.mxu0 0.0
    %419 = vmatpush1.msra.mxu0 %v251
    %420 = vmatprep.subr.mxu0 0.0
    %421 = vmatpush1.msra.mxu0 0.0
    %422 = vmatprep.subr.mxu0 0.0
    %423 = vmatpush1.msra.mxu0 0.0
    %424 = vmatprep.subr.mxu0 0.0
    %425 = vmatpush1.msra.mxu0 0.0
    %426 = vmatprep.subr.mxu0 0.0
    %427 = vmatpush1.msra.mxu0 0.0
    %428 = vmatprep.subr.mxu0 0.0
    %429 = vmatpush1.msra.mxu0 0.0
    %430 = vmatprep.subr.mxu0 0.0
    %431 = vmatpush1.msra.mxu0 0.0
    %432 = vmatprep.subr.mxu0 0.0
    %433 = vmatpush1.msra.mxu0 0.0
    %434 = vmatprep.subr.mxu0 0.0
    %435 = vmatpush1.msra.mxu0 0.0
    %436 = vmatprep.subr.mxu0 0.0
    %437 = vmatpush1.msra.mxu0 0.0
    %438 = vmatprep.subr.mxu0 0.0
    %439 = vmatpush1.msra.mxu0 0.0
    %440 = vmatprep.subr.mxu0 0.0
    %441 = vmatpush1.msra.mxu0 0.0
    %442 = vmatprep.subr.mxu0 0.0
    %443 = vmatpush1.msra.mxu0 0.0
    %444 = vmatprep.subr.mxu0 0.0
    %445 = vmatpush1.msra.mxu0 0.0
    %446 = vmatprep.subr.mxu0 0.0
    %447 = vmatpush1.msra.mxu0 0.0
    %448 = vmatprep.subr.mxu0 0.0
    %449 = vmatpush1.msra.mxu0 0.0
    %450 = vmatprep.subr.mxu0 0.0
    %451 = vmatpush1.msra.mxu0 0.0
    %452 = vmatprep.subr.mxu0 0.0
    %453 = vmatpush1.msra.mxu0 0.0
    %454 = vmatprep.subr.mxu0 0.0
    %455 = vmatpush1.msra.mxu0 0.0
    %456 = vmatprep.subr.mxu0 0.0
    %457 = vmatpush1.msra.mxu0 0.0
    %458 = vmatprep.subr.mxu0 0.0
    %459 = vmatpush1.msra.mxu0 0.0
    %460 = vmatprep.subr.mxu0 0.0
    %461 = vmatpush1.msra.mxu0 0.0
    %462 = vmatprep.subr.mxu0 0.0
    %463 = vmatpush1.msra.mxu0 0.0
    %464 = vmatprep.subr.mxu0 0.0
    %465 = vmatpush1.msra.mxu0 0.0
    %466 = vmatprep.subr.mxu0 0.0
    %467 = vmatpush1.msra.mxu0 0.0
    %468 = vmatprep.subr.mxu0 0.0
    %469 = vmatpush1.msra.mxu0 0.0
    %470 = vmatprep.subr.mxu0 0.0
    %471 = vmatpush1.msra.mxu0 0.0
    %472 = vmatprep.subr.mxu0 0.0
    %473 = vmatpush1.msra.mxu0 0.0
    %474 = vmatprep.subr.mxu0 0.0
    %475 = vmatpush1.msra.mxu0 0.0
    %476 = vmatprep.subr.mxu0 0.0
    %477 = vmatpush1.msra.mxu0 0.0
    %478 = vmatprep.subr.mxu0 0.0
    %479 = vmatpush1.msra.mxu0 0.0
    %480 = vmatprep.mubr.f32.mxu0 0.0
    %481 = vmatmul.mubr.f32.gmra.mrb[0].mxu0 %v411
    %v482 = vpop.f32.mrb[0].mxu0
    %v483 = vadd.f32 0.0, %v482
    %v484 = vpop.f32.mrb[0].mxu0
    %485 = vmatprep.mubr.f32.mxu0 0.0
    %486 = vmatmul.mubr.f32.gmra.mrb[0].mxu0 %v414
    %v487 = vpop.f32.mrb[0].mxu0
    %v488 = vadd.f32 0.0, %v487
    %v489 = vpop.f32.mrb[0].mxu0
    %490 = vdwg.mxu0
    %491 = vxpose.xlu0.b32.start [1/16] %v236, 128
    %492 = vxpose.xlu0.b32.cont [2/16] %v237, 128
    %493 = vxpose.xlu0.b32.cont [3/16] 0.0, 128
    %494 = vxpose.xlu0.b32.cont [4/16] 0.0, 128
    %495 = vxpose.xlu0.b32.cont [5/16] 0.0, 128
    %496 = vxpose.xlu0.b32.cont [6/16] 0.0, 128
    %497 = vxpose.xlu0.b32.cont [7/16] 0.0, 128
    %498 = vxpose.xlu0.b32.cont [8/16] 0.0, 128
    %499 = vxpose.xlu0.b32.cont [9/16] 0.0, 128
    %500 = vxpose.xlu0.b32.cont [10/16] 0.0, 128
    %501 = vxpose.xlu0.b32.cont [11/16] 0.0, 128
    %502 = vxpose.xlu0.b32.cont [12/16] 0.0, 128
    %503 = vxpose.xlu0.b32.cont [13/16] 0.0, 128
    %504 = vxpose.xlu0.b32.cont [14/16] 0.0, 128
    %505 = vxpose.xlu0.b32.cont [15/16] 0.0, 128
    %506 = vxpose.xlu0.b32.end [16/16] 0.0, 128
    %v507 = vpop.trf.xlu0
    %v508 = vpop.trf.xlu0
    %v509 = vpop.trf.xlu0
    %v510 = vpop.trf.xlu0
    %v511 = vpop.trf.xlu0
    %v512 = vpop.trf.xlu0
    %v513 = vpop.trf.xlu0
    %v514 = vpop.trf.xlu0
    %v515 = vpop.trf.xlu0
    %v516 = vpop.trf.xlu0
    %v517 = vpop.trf.xlu0
    %v518 = vpop.trf.xlu0
    %v519 = vpop.trf.xlu0
    %v520 = vpop.trf.xlu0
    %v521 = vpop.trf.xlu0
    %v522 = vpop.trf.xlu0
    %v524 = vsel %vm296, %v507, 0
    %v527 = vsel %vm296, %v508, 0
    %529 = vmatprep.subr.mxu0 0.0
    %530 = vmatpush1.msra.mxu0 %v252
    %531 = vmatprep.subr.mxu0 0.0
    %532 = vmatpush1.msra.mxu0 %v253
    %533 = vmatprep.subr.mxu0 0.0
    %534 = vmatpush1.msra.mxu0 0.0
    %535 = vmatprep.subr.mxu0 0.0
    %536 = vmatpush1.msra.mxu0 0.0
    %537 = vmatprep.subr.mxu0 0.0
    %538 = vmatpush1.msra.mxu0 0.0
    %539 = vmatprep.subr.mxu0 0.0
    %540 = vmatpush1.msra.mxu0 0.0
    %541 = vmatprep.subr.mxu0 0.0
    %542 = vmatpush1.msra.mxu0 0.0
    %543 = vmatprep.subr.mxu0 0.0
    %544 = vmatpush1.msra.mxu0 0.0
    %545 = vmatprep.subr.mxu0 0.0
    %546 = vmatpush1.msra.mxu0 0.0
    %547 = vmatprep.subr.mxu0 0.0
    %548 = vmatpush1.msra.mxu0 0.0
    %549 = vmatprep.subr.mxu0 0.0
    %550 = vmatpush1.msra.mxu0 0.0
    %551 = vmatprep.subr.mxu0 0.0
    %552 = vmatpush1.msra.mxu0 0.0
    %553 = vmatprep.subr.mxu0 0.0
    %554 = vmatpush1.msra.mxu0 0.0
    %555 = vmatprep.subr.mxu0 0.0
    %556 = vmatpush1.msra.mxu0 0.0
    %557 = vmatprep.subr.mxu0 0.0
    %558 = vmatpush1.msra.mxu0 0.0
    %559 = vmatprep.subr.mxu0 0.0
    %560 = vmatpush1.msra.mxu0 0.0
    %561 = vmatprep.subr.mxu0 0.0
    %562 = vmatpush1.msra.mxu0 0.0
    %563 = vmatprep.subr.mxu0 0.0
    %564 = vmatpush1.msra.mxu0 0.0
    %565 = vmatprep.subr.mxu0 0.0
    %566 = vmatpush1.msra.mxu0 0.0
    %567 = vmatprep.subr.mxu0 0.0
    %568 = vmatpush1.msra.mxu0 0.0
    %569 = vmatprep.subr.mxu0 0.0
    %570 = vmatpush1.msra.mxu0 0.0
    %571 = vmatprep.subr.mxu0 0.0
    %572 = vmatpush1.msra.mxu0 0.0
    %573 = vmatprep.subr.mxu0 0.0
    %574 = vmatpush1.msra.mxu0 0.0
    %575 = vmatprep.subr.mxu0 0.0
    %576 = vmatpush1.msra.mxu0 0.0
    %577 = vmatprep.subr.mxu0 0.0
    %578 = vmatpush1.msra.mxu0 0.0
    %579 = vmatprep.subr.mxu0 0.0
    %580 = vmatpush1.msra.mxu0 0.0
    %581 = vmatprep.subr.mxu0 0.0
    %582 = vmatpush1.msra.mxu0 0.0
    %583 = vmatprep.subr.mxu0 0.0
    %584 = vmatpush1.msra.mxu0 0.0
    %585 = vmatprep.subr.mxu0 0.0
    %586 = vmatpush1.msra.mxu0 0.0
    %587 = vmatprep.subr.mxu0 0.0
    %588 = vmatpush1.msra.mxu0 0.0
    %589 = vmatprep.subr.mxu0 0.0
    %590 = vmatpush1.msra.mxu0 0.0
    %591 = vmatprep.subr.mxu0 0.0
    %592 = vmatpush1.msra.mxu0 0.0
    %593 = vmatprep.mubr.f32.mxu0 0.0
    %594 = vmatmul.mubr.f32.gmra.mrb[0].mxu0 %v524
    %v595 = vpop.f32.mrb[0].mxu0
    %v596 = vadd.f32 0.0, %v595
    %v597 = vpop.f32.mrb[0].mxu0
    %598 = vmatprep.mubr.f32.mxu0 0.0
    %599 = vmatmul.mubr.f32.gmra.mrb[0].mxu0 %v527
    %v600 = vpop.f32.mrb[0].mxu0
    %v601 = vadd.f32 0.0, %v600
    %v602 = vpop.f32.mrb[0].mxu0
    %603 = vdwg.mxu0
    %604 = vxpose.xlu0.b32.start [1/16] %v238, 128
    %605 = vxpose.xlu0.b32.cont [2/16] %v239, 128
    %606 = vxpose.xlu0.b32.cont [3/16] 0.0, 128
    %607 = vxpose.xlu0.b32.cont [4/16] 0.0, 128
    %608 = vxpose.xlu0.b32.cont [5/16] 0.0, 128
    %609 = vxpose.xlu0.b32.cont [6/16] 0.0, 128
    %610 = vxpose.xlu0.b32.cont [7/16] 0.0, 128
    %611 = vxpose.xlu0.b32.cont [8/16] 0.0, 128
    %612 = vxpose.xlu0.b32.cont [9/16] 0.0, 128
    %613 = vxpose.xlu0.b32.cont [10/16] 0.0, 128
    %614 = vxpose.xlu0.b32.cont [11/16] 0.0, 128
    %615 = vxpose.xlu0.b32.cont [12/16] 0.0, 128
    %616 = vxpose.xlu0.b32.cont [13/16] 0.0, 128
    %617 = vxpose.xlu0.b32.cont [14/16] 0.0, 128
    %618 = vxpose.xlu0.b32.cont [15/16] 0.0, 128
    %619 = vxpose.xlu0.b32.end [16/16] 0.0, 128
    %v620 = vpop.trf.xlu0
    %v621 = vpop.trf.xlu0
    %v622 = vpop.trf.xlu0
    %v623 = vpop.trf.xlu0
    %v624 = vpop.trf.xlu0
    %v625 = vpop.trf.xlu0
    %v626 = vpop.trf.xlu0
    %v627 = vpop.trf.xlu0
    %v628 = vpop.trf.xlu0
    %v629 = vpop.trf.xlu0
    %v630 = vpop.trf.xlu0
    %v631 = vpop.trf.xlu0
    %v632 = vpop.trf.xlu0
    %v633 = vpop.trf.xlu0
    %v634 = vpop.trf.xlu0
    %v635 = vpop.trf.xlu0
    %v637 = vsel %vm296, %v620, 0
    %v640 = vsel %vm296, %v621, 0
    %642 = vmatprep.subr.mxu0 0.0
    %643 = vmatpush1.msra.mxu0 %v254
    %644 = vmatprep.subr.mxu0 0.0
    %645 = vmatpush1.msra.mxu0 %v255
    %646 = vmatprep.subr.mxu0 0.0
    %647 = vmatpush1.msra.mxu0 0.0
    %648 = vmatprep.subr.mxu0 0.0
    %649 = vmatpush1.msra.mxu0 0.0
    %650 = vmatprep.subr.mxu0 0.0
    %651 = vmatpush1.msra.mxu0 0.0
    %652 = vmatprep.subr.mxu0 0.0
    %653 = vmatpush1.msra.mxu0 0.0
    %654 = vmatprep.subr.mxu0 0.0
    %655 = vmatpush1.msra.mxu0 0.0
    %656 = vmatprep.subr.mxu0 0.0
    %657 = vmatpush1.msra.mxu0 0.0
    %658 = vmatprep.subr.mxu0 0.0
    %659 = vmatpush1.msra.mxu0 0.0
    %660 = vmatprep.subr.mxu0 0.0
    %661 = vmatpush1.msra.mxu0 0.0
    %662 = vmatprep.subr.mxu0 0.0
    %663 = vmatpush1.msra.mxu0 0.0
    %664 = vmatprep.subr.mxu0 0.0
    %665 = vmatpush1.msra.mxu0 0.0
    %666 = vmatprep.subr.mxu0 0.0
    %667 = vmatpush1.msra.mxu0 0.0
    %668 = vmatprep.subr.mxu0 0.0
    %669 = vmatpush1.msra.mxu0 0.0
    %670 = vmatprep.subr.mxu0 0.0
    %671 = vmatpush1.msra.mxu0 0.0
    %672 = vmatprep.subr.mxu0 0.0
    %673 = vmatpush1.msra.mxu0 0.0
    %674 = vmatprep.subr.mxu0 0.0
    %675 = vmatpush1.msra.mxu0 0.0
    %676 = vmatprep.subr.mxu0 0.0
    %677 = vmatpush1.msra.mxu0 0.0
    %678 = vmatprep.subr.mxu0 0.0
    %679 = vmatpush1.msra.mxu0 0.0
    %680 = vmatprep.subr.mxu0 0.0
    %681 = vmatpush1.msra.mxu0 0.0
    %682 = vmatprep.subr.mxu0 0.0
    %683 = vmatpush1.msra.mxu0 0.0
    %684 = vmatprep.subr.mxu0 0.0
    %685 = vmatpush1.msra.mxu0 0.0
    %686 = vmatprep.subr.mxu0 0.0
    %687 = vmatpush1.msra.mxu0 0.0
    %688 = vmatprep.subr.mxu0 0.0
    %689 = vmatpush1.msra.mxu0 0.0
    %690 = vmatprep.subr.mxu0 0.0
    %691 = vmatpush1.msra.mxu0 0.0
    %692 = vmatprep.subr.mxu0 0.0
    %693 = vmatpush1.msra.mxu0 0.0
    %694 = vmatprep.subr.mxu0 0.0
    %695 = vmatpush1.msra.mxu0 0.0
    %696 = vmatprep.subr.mxu0 0.0
    %697 = vmatpush1.msra.mxu0 0.0
    %698 = vmatprep.subr.mxu0 0.0
    %699 = vmatpush1.msra.mxu0 0.0
    %700 = vmatprep.subr.mxu0 0.0
    %701 = vmatpush1.msra.mxu0 0.0
    %702 = vmatprep.subr.mxu0 0.0
    %703 = vmatpush1.msra.mxu0 0.0
    %704 = vmatprep.subr.mxu0 0.0
    %705 = vmatpush1.msra.mxu0 0.0
    %706 = vmatprep.mubr.f32.mxu0 0.0
    %707 = vmatmul.mubr.f32.gmra.mrb[0].mxu0 %v637
    %v708 = vpop.f32.mrb[0].mxu0
    %v709 = vadd.f32 0.0, %v708
    %v710 = vpop.f32.mrb[0].mxu0
    %711 = vmatprep.mubr.f32.mxu0 0.0
    %712 = vmatmul.mubr.f32.gmra.mrb[0].mxu0 %v640
    %v713 = vpop.f32.mrb[0].mxu0
    %v714 = vadd.f32 0.0, %v713
    %v715 = vpop.f32.mrb[0].mxu0
    %716 = vdwg.mxu0
    %717 = vxpose.xlu0.b32.start [1/16] %v240, 128
    %718 = vxpose.xlu0.b32.cont [2/16] %v241, 128
    %719 = vxpose.xlu0.b32.cont [3/16] 0.0, 128
    %720 = vxpose.xlu0.b32.cont [4/16] 0.0, 128
    %721 = vxpose.xlu0.b32.cont [5/16] 0.0, 128
    %722 = vxpose.xlu0.b32.cont [6/16] 0.0, 128
    %723 = vxpose.xlu0.b32.cont [7/16] 0.0, 128
    %724 = vxpose.xlu0.b32.cont [8/16] 0.0, 128
    %725 = vxpose.xlu0.b32.cont [9/16] 0.0, 128
    %726 = vxpose.xlu0.b32.cont [10/16] 0.0, 128
    %727 = vxpose.xlu0.b32.cont [11/16] 0.0, 128
    %728 = vxpose.xlu0.b32.cont [12/16] 0.0, 128
    %729 = vxpose.xlu0.b32.cont [13/16] 0.0, 128
    %730 = vxpose.xlu0.b32.cont [14/16] 0.0, 128
    %731 = vxpose.xlu0.b32.cont [15/16] 0.0, 128
    %732 = vxpose.xlu0.b32.end [16/16] 0.0, 128
    %v733 = vpop.trf.xlu0
    %v734 = vpop.trf.xlu0
    %v735 = vpop.trf.xlu0
    %v736 = vpop.trf.xlu0
    %v737 = vpop.trf.xlu0
    %v738 = vpop.trf.xlu0
    %v739 = vpop.trf.xlu0
    %v740 = vpop.trf.xlu0
    %v741 = vpop.trf.xlu0
    %v742 = vpop.trf.xlu0
    %v743 = vpop.trf.xlu0
    %v744 = vpop.trf.xlu0
    %v745 = vpop.trf.xlu0
    %v746 = vpop.trf.xlu0
    %v747 = vpop.trf.xlu0
    %v748 = vpop.trf.xlu0
    %v750 = vsel %vm296, %v733, 0
    %v753 = vsel %vm296, %v734, 0
    %755 = vmatprep.subr.mxu0 0.0
    %756 = vmatpush1.msra.mxu0 %v256
    %757 = vmatprep.subr.mxu0 0.0
    %758 = vmatpush1.msra.mxu0 %v257
    %759 = vmatprep.subr.mxu0 0.0
    %760 = vmatpush1.msra.mxu0 0.0
    %761 = vmatprep.subr.mxu0 0.0
    %762 = vmatpush1.msra.mxu0 0.0
    %763 = vmatprep.subr.mxu0 0.0
    %764 = vmatpush1.msra.mxu0 0.0
    %765 = vmatprep.subr.mxu0 0.0
    %766 = vmatpush1.msra.mxu0 0.0
    %767 = vmatprep.subr.mxu0 0.0
    %768 = vmatpush1.msra.mxu0 0.0
    %769 = vmatprep.subr.mxu0 0.0
    %770 = vmatpush1.msra.mxu0 0.0
    %771 = vmatprep.subr.mxu0 0.0
    %772 = vmatpush1.msra.mxu0 0.0
    %773 = vmatprep.subr.mxu0 0.0
    %774 = vmatpush1.msra.mxu0 0.0
    %775 = vmatprep.subr.mxu0 0.0
    %776 = vmatpush1.msra.mxu0 0.0
    %777 = vmatprep.subr.mxu0 0.0
    %778 = vmatpush1.msra.mxu0 0.0
    %779 = vmatprep.subr.mxu0 0.0
    %780 = vmatpush1.msra.mxu0 0.0
    %781 = vmatprep.subr.mxu0 0.0
    %782 = vmatpush1.msra.mxu0 0.0
    %783 = vmatprep.subr.mxu0 0.0
    %784 = vmatpush1.msra.mxu0 0.0
    %785 = vmatprep.subr.mxu0 0.0
    %786 = vmatpush1.msra.mxu0 0.0
    %787 = vmatprep.subr.mxu0 0.0
    %788 = vmatpush1.msra.mxu0 0.0
    %789 = vmatprep.subr.mxu0 0.0
    %790 = vmatpush1.msra.mxu0 0.0
    %791 = vmatprep.subr.mxu0 0.0
    %792 = vmatpush1.msra.mxu0 0.0
    %793 = vmatprep.subr.mxu0 0.0
    %794 = vmatpush1.msra.mxu0 0.0
    %795 = vmatprep.subr.mxu0 0.0
    %796 = vmatpush1.msra.mxu0 0.0
    %797 = vmatprep.subr.mxu0 0.0
    %798 = vmatpush1.msra.mxu0 0.0
    %799 = vmatprep.subr.mxu0 0.0
    %800 = vmatpush1.msra.mxu0 0.0
    %801 = vmatprep.subr.mxu0 0.0
    %802 = vmatpush1.msra.mxu0 0.0
    %803 = vmatprep.subr.mxu0 0.0
    %804 = vmatpush1.msra.mxu0 0.0
    %805 = vmatprep.subr.mxu0 0.0
    %806 = vmatpush1.msra.mxu0 0.0
    %807 = vmatprep.subr.mxu0 0.0
    %808 = vmatpush1.msra.mxu0 0.0
    %809 = vmatprep.subr.mxu0 0.0
    %810 = vmatpush1.msra.mxu0 0.0
    %811 = vmatprep.subr.mxu0 0.0
    %812 = vmatpush1.msra.mxu0 0.0
    %813 = vmatprep.subr.mxu0 0.0
    %814 = vmatpush1.msra.mxu0 0.0
    %815 = vmatprep.subr.mxu0 0.0
    %816 = vmatpush1.msra.mxu0 0.0
    %817 = vmatprep.subr.mxu0 0.0
    %818 = vmatpush1.msra.mxu0 0.0
    %819 = vmatprep.mubr.f32.mxu0 0.0
    %820 = vmatmul.mubr.f32.gmra.mrb[0].mxu0 %v750
    %v821 = vpop.f32.mrb[0].mxu0
    %v822 = vadd.f32 0.0, %v821
    %v823 = vpop.f32.mrb[0].mxu0
    %824 = vmatprep.mubr.f32.mxu0 0.0
    %825 = vmatmul.mubr.f32.gmra.mrb[0].mxu0 %v753
    %v826 = vpop.f32.mrb[0].mxu0
    %v827 = vadd.f32 0.0, %v826
    %v828 = vpop.f32.mrb[0].mxu0
    %829 = vdwg.mxu0
    %830 = vxpose.xlu0.b32.start [1/16] %v242, 128
    %831 = vxpose.xlu0.b32.cont [2/16] %v243, 128
    %832 = vxpose.xlu0.b32.cont [3/16] 0.0, 128
    %833 = vxpose.xlu0.b32.cont [4/16] 0.0, 128
    %834 = vxpose.xlu0.b32.cont [5/16] 0.0, 128
    %835 = vxpose.xlu0.b32.cont [6/16] 0.0, 128
    %836 = vxpose.xlu0.b32.cont [7/16] 0.0, 128
    %837 = vxpose.xlu0.b32.cont [8/16] 0.0, 128
    %838 = vxpose.xlu0.b32.cont [9/16] 0.0, 128
    %839 = vxpose.xlu0.b32.cont [10/16] 0.0, 128
    %840 = vxpose.xlu0.b32.cont [11/16] 0.0, 128
    %841 = vxpose.xlu0.b32.cont [12/16] 0.0, 128
    %842 = vxpose.xlu0.b32.cont [13/16] 0.0, 128
    %843 = vxpose.xlu0.b32.cont [14/16] 0.0, 128
    %844 = vxpose.xlu0.b32.cont [15/16] 0.0, 128
    %845 = vxpose.xlu0.b32.end [16/16] 0.0, 128
    %v846 = vpop.trf.xlu0
    %v847 = vpop.trf.xlu0
    %v848 = vpop.trf.xlu0
    %v849 = vpop.trf.xlu0
    %v850 = vpop.trf.xlu0
    %v851 = vpop.trf.xlu0
    %v852 = vpop.trf.xlu0
    %v853 = vpop.trf.xlu0
    %v854 = vpop.trf.xlu0
    %v855 = vpop.trf.xlu0
    %v856 = vpop.trf.xlu0
    %v857 = vpop.trf.xlu0
    %v858 = vpop.trf.xlu0
    %v859 = vpop.trf.xlu0
    %v860 = vpop.trf.xlu0
    %v861 = vpop.trf.xlu0
    %v863 = vsel %vm296, %v846, 0
    %v866 = vsel %vm296, %v847, 0
    %868 = vmatprep.subr.mxu0 0.0
    %869 = vmatpush1.msra.mxu0 %v258
    %870 = vmatprep.subr.mxu0 0.0
    %871 = vmatpush1.msra.mxu0 %v259
    %872 = vmatprep.subr.mxu0 0.0
    %873 = vmatpush1.msra.mxu0 0.0
    %874 = vmatprep.subr.mxu0 0.0
    %875 = vmatpush1.msra.mxu0 0.0
    %876 = vmatprep.subr.mxu0 0.0
    %877 = vmatpush1.msra.mxu0 0.0
    %878 = vmatprep.subr.mxu0 0.0
    %879 = vmatpush1.msra.mxu0 0.0
    %880 = vmatprep.subr.mxu0 0.0
    %881 = vmatpush1.msra.mxu0 0.0
    %882 = vmatprep.subr.mxu0 0.0
    %883 = vmatpush1.msra.mxu0 0.0
    %884 = vmatprep.subr.mxu0 0.0
    %885 = vmatpush1.msra.mxu0 0.0
    %886 = vmatprep.subr.mxu0 0.0
    %887 = vmatpush1.msra.mxu0 0.0
    %888 = vmatprep.subr.mxu0 0.0
    %889 = vmatpush1.msra.mxu0 0.0
    %890 = vmatprep.subr.mxu0 0.0
    %891 = vmatpush1.msra.mxu0 0.0
    %892 = vmatprep.subr.mxu0 0.0
    %893 = vmatpush1.msra.mxu0 0.0
    %894 = vmatprep.subr.mxu0 0.0
    %895 = vmatpush1.msra.mxu0 0.0
    %896 = vmatprep.subr.mxu0 0.0
    %897 = vmatpush1.msra.mxu0 0.0
    %898 = vmatprep.subr.mxu0 0.0
    %899 = vmatpush1.msra.mxu0 0.0
    %900 = vmatprep.subr.mxu0 0.0
    %901 = vmatpush1.msra.mxu0 0.0
    %902 = vmatprep.subr.mxu0 0.0
    %903 = vmatpush1.msra.mxu0 0.0
    %904 = vmatprep.subr.mxu0 0.0
    %905 = vmatpush1.msra.mxu0 0.0
    %906 = vmatprep.subr.mxu0 0.0
    %907 = vmatpush1.msra.mxu0 0.0
    %908 = vmatprep.subr.mxu0 0.0
    %909 = vmatpush1.msra.mxu0 0.0
    %910 = vmatprep.subr.mxu0 0.0
    %911 = vmatpush1.msra.mxu0 0.0
    %912 = vmatprep.subr.mxu0 0.0
    %913 = vmatpush1.msra.mxu0 0.0
    %914 = vmatprep.subr.mxu0 0.0
    %915 = vmatpush1.msra.mxu0 0.0
    %916 = vmatprep.subr.mxu0 0.0
    %917 = vmatpush1.msra.mxu0 0.0
    %918 = vmatprep.subr.mxu0 0.0
    %919 = vmatpush1.msra.mxu0 0.0
    %920 = vmatprep.subr.mxu0 0.0
    %921 = vmatpush1.msra.mxu0 0.0
    %922 = vmatprep.subr.mxu0 0.0
    %923 = vmatpush1.msra.mxu0 0.0
    %924 = vmatprep.subr.mxu0 0.0
    %925 = vmatpush1.msra.mxu0 0.0
    %926 = vmatprep.subr.mxu0 0.0
    %927 = vmatpush1.msra.mxu0 0.0
    %928 = vmatprep.subr.mxu0 0.0
    %929 = vmatpush1.msra.mxu0 0.0
    %930 = vmatprep.subr.mxu0 0.0
    %931 = vmatpush1.msra.mxu0 0.0
    %932 = vmatprep.mubr.f32.mxu0 0.0
    %933 = vmatmul.mubr.f32.gmra.mrb[0].mxu0 %v863
    %v934 = vpop.f32.mrb[0].mxu0
    %v935 = vadd.f32 0.0, %v934
    %v936 = vpop.f32.mrb[0].mxu0
    %937 = vmatprep.mubr.f32.mxu0 0.0
    %938 = vmatmul.mubr.f32.gmra.mrb[0].mxu0 %v866
    %v939 = vpop.f32.mrb[0].mxu0
    %v940 = vadd.f32 0.0, %v939
    %v941 = vpop.f32.mrb[0].mxu0
    %942 = vdwg.mxu0
    %943 = vxpose.xlu0.b32.start [1/16] %v244, 128
    %944 = vxpose.xlu0.b32.cont [2/16] %v245, 128
    %945 = vxpose.xlu0.b32.cont [3/16] 0.0, 128
    %946 = vxpose.xlu0.b32.cont [4/16] 0.0, 128
    %947 = vxpose.xlu0.b32.cont [5/16] 0.0, 128
    %948 = vxpose.xlu0.b32.cont [6/16] 0.0, 128
    %949 = vxpose.xlu0.b32.cont [7/16] 0.0, 128
    %950 = vxpose.xlu0.b32.cont [8/16] 0.0, 128
    %951 = vxpose.xlu0.b32.cont [9/16] 0.0, 128
    %952 = vxpose.xlu0.b32.cont [10/16] 0.0, 128
    %953 = vxpose.xlu0.b32.cont [11/16] 0.0, 128
    %954 = vxpose.xlu0.b32.cont [12/16] 0.0, 128
    %955 = vxpose.xlu0.b32.cont [13/16] 0.0, 128
    %956 = vxpose.xlu0.b32.cont [14/16] 0.0, 128
    %957 = vxpose.xlu0.b32.cont [15/16] 0.0, 128
    %958 = vxpose.xlu0.b32.end [16/16] 0.0, 128
    %v959 = vpop.trf.xlu0
    %v960 = vpop.trf.xlu0
    %v961 = vpop.trf.xlu0
    %v962 = vpop.trf.xlu0
    %v963 = vpop.trf.xlu0
    %v964 = vpop.trf.xlu0
    %v965 = vpop.trf.xlu0
    %v966 = vpop.trf.xlu0
    %v967 = vpop.trf.xlu0
    %v968 = vpop.trf.xlu0
    %v969 = vpop.trf.xlu0
    %v970 = vpop.trf.xlu0
    %v971 = vpop.trf.xlu0
    %v972 = vpop.trf.xlu0
    %v973 = vpop.trf.xlu0
    %v974 = vpop.trf.xlu0
    %v976 = vsel %vm296, %v959, 0
    %v979 = vsel %vm296, %v960, 0
    %981 = vmatprep.subr.mxu0 0.0
    %982 = vmatpush1.msra.mxu0 %v260
    %983 = vmatprep.subr.mxu0 0.0
    %984 = vmatpush1.msra.mxu0 %v261
    %985 = vmatprep.subr.mxu0 0.0
    %986 = vmatpush1.msra.mxu0 0.0
    %987 = vmatprep.subr.mxu0 0.0
    %988 = vmatpush1.msra.mxu0 0.0
    %989 = vmatprep.subr.mxu0 0.0
    %990 = vmatpush1.msra.mxu0 0.0
    %991 = vmatprep.subr.mxu0 0.0
    %992 = vmatpush1.msra.mxu0 0.0
    %993 = vmatprep.subr.mxu0 0.0
    %994 = vmatpush1.msra.mxu0 0.0
    %995 = vmatprep.subr.mxu0 0.0
    %996 = vmatpush1.msra.mxu0 0.0
    %997 = vmatprep.subr.mxu0 0.0
    %998 = vmatpush1.msra.mxu0 0.0
    %999 = vmatprep.subr.mxu0 0.0
    %1000 = vmatpush1.msra.mxu0 0.0
    %1001 = vmatprep.subr.mxu0 0.0
    %1002 = vmatpush1.msra.mxu0 0.0
    %1003 = vmatprep.subr.mxu0 0.0
    %1004 = vmatpush1.msra.mxu0 0.0
    %1005 = vmatprep.subr.mxu0 0.0
    %1006 = vmatpush1.msra.mxu0 0.0
    %1007 = vmatprep.subr.mxu0 0.0
    %1008 = vmatpush1.msra.mxu0 0.0
    %1009 = vmatprep.subr.mxu0 0.0
    %1010 = vmatpush1.msra.mxu0 0.0
    %1011 = vmatprep.subr.mxu0 0.0
    %1012 = vmatpush1.msra.mxu0 0.0
    %1013 = vmatprep.subr.mxu0 0.0
    %1014 = vmatpush1.msra.mxu0 0.0
    %1015 = vmatprep.subr.mxu0 0.0
    %1016 = vmatpush1.msra.mxu0 0.0
    %1017 = vmatprep.subr.mxu0 0.0
    %1018 = vmatpush1.msra.mxu0 0.0
    %1019 = vmatprep.subr.mxu0 0.0
    %1020 = vmatpush1.msra.mxu0 0.0
    %1021 = vmatprep.subr.mxu0 0.0
    %1022 = vmatpush1.msra.mxu0 0.0
    %1023 = vmatprep.subr.mxu0 0.0
    %1024 = vmatpush1.msra.mxu0 0.0
    %1025 = vmatprep.subr.mxu0 0.0
    %1026 = vmatpush1.msra.mxu0 0.0
    %1027 = vmatprep.subr.mxu0 0.0
    %1028 = vmatpush1.msra.mxu0 0.0
    %1029 = vmatprep.subr.mxu0 0.0
    %1030 = vmatpush1.msra.mxu0 0.0
    %1031 = vmatprep.subr.mxu0 0.0
    %1032 = vmatpush1.msra.mxu0 0.0
    %1033 = vmatprep.subr.mxu0 0.0
    %1034 = vmatpush1.msra.mxu0 0.0
    %1035 = vmatprep.subr.mxu0 0.0
    %1036 = vmatpush1.msra.mxu0 0.0
    %1037 = vmatprep.subr.mxu0 0.0
    %1038 = vmatpush1.msra.mxu0 0.0
    %1039 = vmatprep.subr.mxu0 0.0
    %1040 = vmatpush1.msra.mxu0 0.0
    %1041 = vmatprep.subr.mxu0 0.0
    %1042 = vmatpush1.msra.mxu0 0.0
    %1043 = vmatprep.subr.mxu0 0.0
    %1044 = vmatpush1.msra.mxu0 0.0
    %1045 = vmatprep.mubr.f32.mxu0 0.0
    %1046 = vmatmul.mubr.f32.gmra.mrb[0].mxu0 %v976
    %v1047 = vpop.f32.mrb[0].mxu0
    %v1048 = vadd.f32 0.0, %v1047
    %v1049 = vpop.f32.mrb[0].mxu0
    %1050 = vmatprep.mubr.f32.mxu0 0.0
    %1051 = vmatmul.mubr.f32.gmra.mrb[0].mxu0 %v979
    %v1052 = vpop.f32.mrb[0].mxu0
    %v1053 = vadd.f32 0.0, %v1052
    %v1054 = vpop.f32.mrb[0].mxu0
    %1055 = vdwg.mxu0
    %1056 = vxpose.xlu0.b32.start [1/16] %v246, 128
    %1057 = vxpose.xlu0.b32.cont [2/16] %v247, 128
    %1058 = vxpose.xlu0.b32.cont [3/16] 0.0, 128
    %1059 = vxpose.xlu0.b32.cont [4/16] 0.0, 128
    %1060 = vxpose.xlu0.b32.cont [5/16] 0.0, 128
    %1061 = vxpose.xlu0.b32.cont [6/16] 0.0, 128
    %1062 = vxpose.xlu0.b32.cont [7/16] 0.0, 128
    %1063 = vxpose.xlu0.b32.cont [8/16] 0.0, 128
    %1064 = vxpose.xlu0.b32.cont [9/16] 0.0, 128
    %1065 = vxpose.xlu0.b32.cont [10/16] 0.0, 128
    %1066 = vxpose.xlu0.b32.cont [11/16] 0.0, 128
    %1067 = vxpose.xlu0.b32.cont [12/16] 0.0, 128
    %1068 = vxpose.xlu0.b32.cont [13/16] 0.0, 128
    %1069 = vxpose.xlu0.b32.cont [14/16] 0.0, 128
    %1070 = vxpose.xlu0.b32.cont [15/16] 0.0, 128
    %1071 = vxpose.xlu0.b32.end [16/16] 0.0, 128
    %v1072 = vpop.trf.xlu0
    %v1073 = vpop.trf.xlu0
    %v1074 = vpop.trf.xlu0
    %v1075 = vpop.trf.xlu0
    %v1076 = vpop.trf.xlu0
    %v1077 = vpop.trf.xlu0
    %v1078 = vpop.trf.xlu0
    %v1079 = vpop.trf.xlu0
    %v1080 = vpop.trf.xlu0
    %v1081 = vpop.trf.xlu0
    %v1082 = vpop.trf.xlu0
    %v1083 = vpop.trf.xlu0
    %v1084 = vpop.trf.xlu0
    %v1085 = vpop.trf.xlu0
    %v1086 = vpop.trf.xlu0
    %v1087 = vpop.trf.xlu0
    %v1089 = vsel %vm296, %v1072, 0
    %v1092 = vsel %vm296, %v1073, 0
    %1094 = vmatprep.subr.mxu0 0.0
    %1095 = vmatpush1.msra.mxu0 %v262
    %1096 = vmatprep.subr.mxu0 0.0
    %1097 = vmatpush1.msra.mxu0 %v263
    %1098 = vmatprep.subr.mxu0 0.0
    %1099 = vmatpush1.msra.mxu0 0.0
    %1100 = vmatprep.subr.mxu0 0.0
    %1101 = vmatpush1.msra.mxu0 0.0
    %1102 = vmatprep.subr.mxu0 0.0
    %1103 = vmatpush1.msra.mxu0 0.0
    %1104 = vmatprep.subr.mxu0 0.0
    %1105 = vmatpush1.msra.mxu0 0.0
    %1106 = vmatprep.subr.mxu0 0.0
    %1107 = vmatpush1.msra.mxu0 0.0
    %1108 = vmatprep.subr.mxu0 0.0
    %1109 = vmatpush1.msra.mxu0 0.0
    %1110 = vmatprep.subr.mxu0 0.0
    %1111 = vmatpush1.msra.mxu0 0.0
    %1112 = vmatprep.subr.mxu0 0.0
    %1113 = vmatpush1.msra.mxu0 0.0
    %1114 = vmatprep.subr.mxu0 0.0
    %1115 = vmatpush1.msra.mxu0 0.0
    %1116 = vmatprep.subr.mxu0 0.0
    %1117 = vmatpush1.msra.mxu0 0.0
    %1118 = vmatprep.subr.mxu0 0.0
    %1119 = vmatpush1.msra.mxu0 0.0
    %1120 = vmatprep.subr.mxu0 0.0
    %1121 = vmatpush1.msra.mxu0 0.0
    %1122 = vmatprep.subr.mxu0 0.0
    %1123 = vmatpush1.msra.mxu0 0.0
    %1124 = vmatprep.subr.mxu0 0.0
    %1125 = vmatpush1.msra.mxu0 0.0
    %1126 = vmatprep.subr.mxu0 0.0
    %1127 = vmatpush1.msra.mxu0 0.0
    %1128 = vmatprep.subr.mxu0 0.0
    %1129 = vmatpush1.msra.mxu0 0.0
    %1130 = vmatprep.subr.mxu0 0.0
    %1131 = vmatpush1.msra.mxu0 0.0
    %1132 = vmatprep.subr.mxu0 0.0
    %1133 = vmatpush1.msra.mxu0 0.0
    %1134 = vmatprep.subr.mxu0 0.0
    %1135 = vmatpush1.msra.mxu0 0.0
    %1136 = vmatprep.subr.mxu0 0.0
    %1137 = vmatpush1.msra.mxu0 0.0
    %1138 = vmatprep.subr.mxu0 0.0
    %1139 = vmatpush1.msra.mxu0 0.0
    %1140 = vmatprep.subr.mxu0 0.0
    %1141 = vmatpush1.msra.mxu0 0.0
    %1142 = vmatprep.subr.mxu0 0.0
    %1143 = vmatpush1.msra.mxu0 0.0
    %1144 = vmatprep.subr.mxu0 0.0
    %1145 = vmatpush1.msra.mxu0 0.0
    %1146 = vmatprep.subr.mxu0 0.0
    %1147 = vmatpush1.msra.mxu0 0.0
    %1148 = vmatprep.subr.mxu0 0.0
    %1149 = vmatpush1.msra.mxu0 0.0
    %1150 = vmatprep.subr.mxu0 0.0
    %1151 = vmatpush1.msra.mxu0 0.0
    %1152 = vmatprep.subr.mxu0 0.0
    %1153 = vmatpush1.msra.mxu0 0.0
    %1154 = vmatprep.subr.mxu0 0.0
    %1155 = vmatpush1.msra.mxu0 0.0
    %1156 = vmatprep.subr.mxu0 0.0
    %1157 = vmatpush1.msra.mxu0 0.0
    %1158 = vmatprep.mubr.f32.mxu0 0.0
    %1159 = vmatmul.mubr.f32.gmra.mrb[0].mxu0 %v1089
    %v1160 = vpop.f32.mrb[0].mxu0
    %v1161 = vadd.f32 0.0, %v1160
    %v1162 = vpop.f32.mrb[0].mxu0
    %1163 = vmatprep.mubr.f32.mxu0 0.0
    %1164 = vmatmul.mubr.f32.gmra.mrb[0].mxu0 %v1092
    %v1165 = vpop.f32.mrb[0].mxu0
    %v1166 = vadd.f32 0.0, %v1165
    %v1167 = vpop.f32.mrb[0].mxu0
    %1168 = vdwg.mxu0
    %v1170 = vsel %vm296, %v152, 0
    %v1173 = vsel %vm296, %v153, 0
    %1175 = vmatprep.subr.mxu0 0.0
    %1176 = vmatpush1.msra.mxu0 %v370
    %1177 = vmatprep.subr.mxu0 0.0
    %1178 = vmatpush1.msra.mxu0 %v375
    %1179 = vmatprep.subr.mxu0 0.0
    %1180 = vmatpush1.msra.mxu0 0.0
    %1181 = vmatprep.subr.mxu0 0.0
    %1182 = vmatpush1.msra.mxu0 0.0
    %1183 = vmatprep.subr.mxu0 0.0
    %1184 = vmatpush1.msra.mxu0 0.0
    %1185 = vmatprep.subr.mxu0 0.0
    %1186 = vmatpush1.msra.mxu0 0.0
    %1187 = vmatprep.subr.mxu0 0.0
    %1188 = vmatpush1.msra.mxu0 0.0
    %1189 = vmatprep.subr.mxu0 0.0
    %1190 = vmatpush1.msra.mxu0 0.0
    %1191 = vmatprep.subr.mxu0 0.0
    %1192 = vmatpush1.msra.mxu0 0.0
    %1193 = vmatprep.subr.mxu0 0.0
    %1194 = vmatpush1.msra.mxu0 0.0
    %1195 = vmatprep.subr.mxu0 0.0
    %1196 = vmatpush1.msra.mxu0 0.0
    %1197 = vmatprep.subr.mxu0 0.0
    %1198 = vmatpush1.msra.mxu0 0.0
    %1199 = vmatprep.subr.mxu0 0.0
    %1200 = vmatpush1.msra.mxu0 0.0
    %1201 = vmatprep.subr.mxu0 0.0
    %1202 = vmatpush1.msra.mxu0 0.0
    %1203 = vmatprep.subr.mxu0 0.0
    %1204 = vmatpush1.msra.mxu0 0.0
    %1205 = vmatprep.subr.mxu0 0.0
    %1206 = vmatpush1.msra.mxu0 0.0
    %1207 = vmatprep.subr.mxu0 0.0
    %1208 = vmatpush1.msra.mxu0 0.0
    %1209 = vmatprep.subr.mxu0 0.0
    %1210 = vmatpush1.msra.mxu0 0.0
    %1211 = vmatprep.subr.mxu0 0.0
    %1212 = vmatpush1.msra.mxu0 0.0
    %1213 = vmatprep.subr.mxu0 0.0
    %1214 = vmatpush1.msra.mxu0 0.0
    %1215 = vmatprep.subr.mxu0 0.0
    %1216 = vmatpush1.msra.mxu0 0.0
    %1217 = vmatprep.subr.mxu0 0.0
    %1218 = vmatpush1.msra.mxu0 0.0
    %1219 = vmatprep.subr.mxu0 0.0
    %1220 = vmatpush1.msra.mxu0 0.0
    %1221 = vmatprep.subr.mxu0 0.0
    %1222 = vmatpush1.msra.mxu0 0.0
    %1223 = vmatprep.subr.mxu0 0.0
    %1224 = vmatpush1.msra.mxu0 0.0
    %1225 = vmatprep.subr.mxu0 0.0
    %1226 = vmatpush1.msra.mxu0 0.0
    %1227 = vmatprep.subr.mxu0 0.0
    %1228 = vmatpush1.msra.mxu0 0.0
    %1229 = vmatprep.subr.mxu0 0.0
    %1230 = vmatpush1.msra.mxu0 0.0
    %1231 = vmatprep.subr.mxu0 0.0
    %1232 = vmatpush1.msra.mxu0 0.0
    %1233 = vmatprep.subr.mxu0 0.0
    %1234 = vmatpush1.msra.mxu0 0.0
    %1235 = vmatprep.subr.mxu0 0.0
    %1236 = vmatpush1.msra.mxu0 0.0
    %1237 = vmatprep.subr.mxu0 0.0
    %1238 = vmatpush1.msra.mxu0 0.0
    %1239 = vmatprep.mubr.f32.mxu0 0.0
    %1240 = vmatmul.mubr.f32.gmra.mrb[0].mxu0 %v1170
    %v1241 = vpop.f32.mrb[0].mxu0
    %v1242 = vadd.f32 0.0, %v1241
    %v1243 = vpop.f32.mrb[0].mxu0
    %1244 = vmatprep.mubr.f32.mxu0 0.0
    %1245 = vmatmul.mubr.f32.gmra.mrb[0].mxu0 %v1173
    %v1246 = vpop.f32.mrb[0].mxu0
    %v1247 = vadd.f32 0.0, %v1246
    %v1248 = vpop.f32.mrb[0].mxu0
    %1249 = vdwg.mxu0
    %v1251 = vsel %vm296, %v154, 0
    %v1254 = vsel %vm296, %v155, 0
    %1256 = vmatprep.subr.mxu0 0.0
    %1257 = vmatpush1.msra.mxu0 %v483
    %1258 = vmatprep.subr.mxu0 0.0
    %1259 = vmatpush1.msra.mxu0 %v488
    %1260 = vmatprep.subr.mxu0 0.0
    %1261 = vmatpush1.msra.mxu0 0.0
    %1262 = vmatprep.subr.mxu0 0.0
    %1263 = vmatpush1.msra.mxu0 0.0
    %1264 = vmatprep.subr.mxu0 0.0
    %1265 = vmatpush1.msra.mxu0 0.0
    %1266 = vmatprep.subr.mxu0 0.0
    %1267 = vmatpush1.msra.mxu0 0.0
    %1268 = vmatprep.subr.mxu0 0.0
    %1269 = vmatpush1.msra.mxu0 0.0
    %1270 = vmatprep.subr.mxu0 0.0
    %1271 = vmatpush1.msra.mxu0 0.0
    %1272 = vmatprep.subr.mxu0 0.0
    %1273 = vmatpush1.msra.mxu0 0.0
    %1274 = vmatprep.subr.mxu0 0.0
    %1275 = vmatpush1.msra.mxu0 0.0
    %1276 = vmatprep.subr.mxu0 0.0
    %1277 = vmatpush1.msra.mxu0 0.0
    %1278 = vmatprep.subr.mxu0 0.0
    %1279 = vmatpush1.msra.mxu0 0.0
    %1280 = vmatprep.subr.mxu0 0.0
    %1281 = vmatpush1.msra.mxu0 0.0
    %1282 = vmatprep.subr.mxu0 0.0
    %1283 = vmatpush1.msra.mxu0 0.0
    %1284 = vmatprep.subr.mxu0 0.0
    %1285 = vmatpush1.msra.mxu0 0.0
    %1286 = vmatprep.subr.mxu0 0.0
    %1287 = vmatpush1.msra.mxu0 0.0
    %1288 = vmatprep.subr.mxu0 0.0
    %1289 = vmatpush1.msra.mxu0 0.0
    %1290 = vmatprep.subr.mxu0 0.0
    %1291 = vmatpush1.msra.mxu0 0.0
    %1292 = vmatprep.subr.mxu0 0.0
    %1293 = vmatpush1.msra.mxu0 0.0
    %1294 = vmatprep.subr.mxu0 0.0
    %1295 = vmatpush1.msra.mxu0 0.0
    %1296 = vmatprep.subr.mxu0 0.0
    %1297 = vmatpush1.msra.mxu0 0.0
    %1298 = vmatprep.subr.mxu0 0.0
    %1299 = vmatpush1.msra.mxu0 0.0
    %1300 = vmatprep.subr.mxu0 0.0
    %1301 = vmatpush1.msra.mxu0 0.0
    %1302 = vmatprep.subr.mxu0 0.0
    %1303 = vmatpush1.msra.mxu0 0.0
    %1304 = vmatprep.subr.mxu0 0.0
    %1305 = vmatpush1.msra.mxu0 0.0
    %1306 = vmatprep.subr.mxu0 0.0
    %1307 = vmatpush1.msra.mxu0 0.0
    %1308 = vmatprep.subr.mxu0 0.0
    %1309 = vmatpush1.msra.mxu0 0.0
    %1310 = vmatprep.subr.mxu0 0.0
    %1311 = vmatpush1.msra.mxu0 0.0
    %1312 = vmatprep.subr.mxu0 0.0
    %1313 = vmatpush1.msra.mxu0 0.0
    %1314 = vmatprep.subr.mxu0 0.0
    %1315 = vmatpush1.msra.mxu0 0.0
    %1316 = vmatprep.subr.mxu0 0.0
    %1317 = vmatpush1.msra.mxu0 0.0
    %1318 = vmatprep.subr.mxu0 0.0
    %1319 = vmatpush1.msra.mxu0 0.0
    %1320 = vmatprep.mubr.f32.mxu0 0.0
    %1321 = vmatmul.mubr.f32.gmra.mrb[0].mxu0 %v1251
    %v1322 = vpop.f32.mrb[0].mxu0
    %v1323 = vadd.f32 0.0, %v1322
    %v1324 = vpop.f32.mrb[0].mxu0
    %1325 = vmatprep.mubr.f32.mxu0 0.0
    %1326 = vmatmul.mubr.f32.gmra.mrb[0].mxu0 %v1254
    %v1327 = vpop.f32.mrb[0].mxu0
    %v1328 = vadd.f32 0.0, %v1327
    %v1329 = vpop.f32.mrb[0].mxu0
    %1330 = vdwg.mxu0
    %v1332 = vsel %vm296, %v156, 0
    %v1335 = vsel %vm296, %v157, 0
    %1337 = vmatprep.subr.mxu0 0.0
    %1338 = vmatpush1.msra.mxu0 %v596
    %1339 = vmatprep.subr.mxu0 0.0
    %1340 = vmatpush1.msra.mxu0 %v601
    %1341 = vmatprep.subr.mxu0 0.0
    %1342 = vmatpush1.msra.mxu0 0.0
    %1343 = vmatprep.subr.mxu0 0.0
    %1344 = vmatpush1.msra.mxu0 0.0
    %1345 = vmatprep.subr.mxu0 0.0
    %1346 = vmatpush1.msra.mxu0 0.0
    %1347 = vmatprep.subr.mxu0 0.0
    %1348 = vmatpush1.msra.mxu0 0.0
    %1349 = vmatprep.subr.mxu0 0.0
    %1350 = vmatpush1.msra.mxu0 0.0
    %1351 = vmatprep.subr.mxu0 0.0
    %1352 = vmatpush1.msra.mxu0 0.0
    %1353 = vmatprep.subr.mxu0 0.0
    %1354 = vmatpush1.msra.mxu0 0.0
    %1355 = vmatprep.subr.mxu0 0.0
    %1356 = vmatpush1.msra.mxu0 0.0
    %1357 = vmatprep.subr.mxu0 0.0
    %1358 = vmatpush1.msra.mxu0 0.0
    %1359 = vmatprep.subr.mxu0 0.0
    %1360 = vmatpush1.msra.mxu0 0.0
    %1361 = vmatprep.subr.mxu0 0.0
    %1362 = vmatpush1.msra.mxu0 0.0
    %1363 = vmatprep.subr.mxu0 0.0
    %1364 = vmatpush1.msra.mxu0 0.0
    %1365 = vmatprep.subr.mxu0 0.0
    %1366 = vmatpush1.msra.mxu0 0.0
    %1367 = vmatprep.subr.mxu0 0.0
    %1368 = vmatpush1.msra.mxu0 0.0
    %1369 = vmatprep.subr.mxu0 0.0
    %1370 = vmatpush1.msra.mxu0 0.0
    %1371 = vmatprep.subr.mxu0 0.0
    %1372 = vmatpush1.msra.mxu0 0.0
    %1373 = vmatprep.subr.mxu0 0.0
    %1374 = vmatpush1.msra.mxu0 0.0
    %1375 = vmatprep.subr.mxu0 0.0
    %1376 = vmatpush1.msra.mxu0 0.0
    %1377 = vmatprep.subr.mxu0 0.0
    %1378 = vmatpush1.msra.mxu0 0.0
    %1379 = vmatprep.subr.mxu0 0.0
    %1380 = vmatpush1.msra.mxu0 0.0
    %1381 = vmatprep.subr.mxu0 0.0
    %1382 = vmatpush1.msra.mxu0 0.0
    %1383 = vmatprep.subr.mxu0 0.0
    %1384 = vmatpush1.msra.mxu0 0.0
    %1385 = vmatprep.subr.mxu0 0.0
    %1386 = vmatpush1.msra.mxu0 0.0
    %1387 = vmatprep.subr.mxu0 0.0
    %1388 = vmatpush1.msra.mxu0 0.0
    %1389 = vmatprep.subr.mxu0 0.0
    %1390 = vmatpush1.msra.mxu0 0.0
    %1391 = vmatprep.subr.mxu0 0.0
    %1392 = vmatpush1.msra.mxu0 0.0
    %1393 = vmatprep.subr.mxu0 0.0
    %1394 = vmatpush1.msra.mxu0 0.0
    %1395 = vmatprep.subr.mxu0 0.0
    %1396 = vmatpush1.msra.mxu0 0.0
    %1397 = vmatprep.subr.mxu0 0.0
    %1398 = vmatpush1.msra.mxu0 0.0
    %1399 = vmatprep.subr.mxu0 0.0
    %1400 = vmatpush1.msra.mxu0 0.0
    %1401 = vmatprep.mubr.f32.mxu0 0.0
    %1402 = vmatmul.mubr.f32.gmra.mrb[0].mxu0 %v1332
    %v1403 = vpop.f32.mrb[0].mxu0
    %v1404 = vadd.f32 0.0, %v1403
    %v1405 = vpop.f32.mrb[0].mxu0
    %1406 = vmatprep.mubr.f32.mxu0 0.0
    %1407 = vmatmul.mubr.f32.gmra.mrb[0].mxu0 %v1335
    %v1408 = vpop.f32.mrb[0].mxu0
    %v1409 = vadd.f32 0.0, %v1408
    %v1410 = vpop.f32.mrb[0].mxu0
    %1411 = vdwg.mxu0
    %v1413 = vsel %vm296, %v158, 0
    %v1416 = vsel %vm296, %v159, 0
    %1418 = vmatprep.subr.mxu0 0.0
    %1419 = vmatpush1.msra.mxu0 %v709
    %1420 = vmatprep.subr.mxu0 0.0
    %1421 = vmatpush1.msra.mxu0 %v714
    %1422 = vmatprep.subr.mxu0 0.0
    %1423 = vmatpush1.msra.mxu0 0.0
    %1424 = vmatprep.subr.mxu0 0.0
    %1425 = vmatpush1.msra.mxu0 0.0
    %1426 = vmatprep.subr.mxu0 0.0
    %1427 = vmatpush1.msra.mxu0 0.0
    %1428 = vmatprep.subr.mxu0 0.0
    %1429 = vmatpush1.msra.mxu0 0.0
    %1430 = vmatprep.subr.mxu0 0.0
    %1431 = vmatpush1.msra.mxu0 0.0
    %1432 = vmatprep.subr.mxu0 0.0
    %1433 = vmatpush1.msra.mxu0 0.0
    %1434 = vmatprep.subr.mxu0 0.0
    %1435 = vmatpush1.msra.mxu0 0.0
    %1436 = vmatprep.subr.mxu0 0.0
    %1437 = vmatpush1.msra.mxu0 0.0
    %1438 = vmatprep.subr.mxu0 0.0
    %1439 = vmatpush1.msra.mxu0 0.0
    %1440 = vmatprep.subr.mxu0 0.0
    %1441 = vmatpush1.msra.mxu0 0.0
    %1442 = vmatprep.subr.mxu0 0.0
    %1443 = vmatpush1.msra.mxu0 0.0
    %1444 = vmatprep.subr.mxu0 0.0
    %1445 = vmatpush1.msra.mxu0 0.0
    %1446 = vmatprep.subr.mxu0 0.0
    %1447 = vmatpush1.msra.mxu0 0.0
    %1448 = vmatprep.subr.mxu0 0.0
    %1449 = vmatpush1.msra.mxu0 0.0
    %1450 = vmatprep.subr.mxu0 0.0
    %1451 = vmatpush1.msra.mxu0 0.0
    %1452 = vmatprep.subr.mxu0 0.0
    %1453 = vmatpush1.msra.mxu0 0.0
    %1454 = vmatprep.subr.mxu0 0.0
    %1455 = vmatpush1.msra.mxu0 0.0
    %1456 = vmatprep.subr.mxu0 0.0
    %1457 = vmatpush1.msra.mxu0 0.0
    %1458 = vmatprep.subr.mxu0 0.0
    %1459 = vmatpush1.msra.mxu0 0.0
    %1460 = vmatprep.subr.mxu0 0.0
    %1461 = vmatpush1.msra.mxu0 0.0
    %1462 = vmatprep.subr.mxu0 0.0
    %1463 = vmatpush1.msra.mxu0 0.0
    %1464 = vmatprep.subr.mxu0 0.0
    %1465 = vmatpush1.msra.mxu0 0.0
    %1466 = vmatprep.subr.mxu0 0.0
    %1467 = vmatpush1.msra.mxu0 0.0
    %1468 = vmatprep.subr.mxu0 0.0
    %1469 = vmatpush1.msra.mxu0 0.0
    %1470 = vmatprep.subr.mxu0 0.0
    %1471 = vmatpush1.msra.mxu0 0.0
    %1472 = vmatprep.subr.mxu0 0.0
    %1473 = vmatpush1.msra.mxu0 0.0
    %1474 = vmatprep.subr.mxu0 0.0
    %1475 = vmatpush1.msra.mxu0 0.0
    %1476 = vmatprep.subr.mxu0 0.0
    %1477 = vmatpush1.msra.mxu0 0.0
    %1478 = vmatprep.subr.mxu0 0.0
    %1479 = vmatpush1.msra.mxu0 0.0
    %1480 = vmatprep.subr.mxu0 0.0
    %1481 = vmatpush1.msra.mxu0 0.0
    %1482 = vmatprep.mubr.f32.mxu0 0.0
    %1483 = vmatmul.mubr.f32.gmra.mrb[0].mxu0 %v1413
    %v1484 = vpop.f32.mrb[0].mxu0
    %v1485 = vadd.f32 0.0, %v1484
    %v1486 = vpop.f32.mrb[0].mxu0
    %1487 = vmatprep.mubr.f32.mxu0 0.0
    %1488 = vmatmul.mubr.f32.gmra.mrb[0].mxu0 %v1416
    %v1489 = vpop.f32.mrb[0].mxu0
    %v1490 = vadd.f32 0.0, %v1489
    %v1491 = vpop.f32.mrb[0].mxu0
    %1492 = vdwg.mxu0
    %v1494 = vsel %vm296, %v160, 0
    %v1497 = vsel %vm296, %v161, 0
    %1499 = vmatprep.subr.mxu0 0.0
    %1500 = vmatpush1.msra.mxu0 %v822
    %1501 = vmatprep.subr.mxu0 0.0
    %1502 = vmatpush1.msra.mxu0 %v827
    %1503 = vmatprep.subr.mxu0 0.0
    %1504 = vmatpush1.msra.mxu0 0.0
    %1505 = vmatprep.subr.mxu0 0.0
    %1506 = vmatpush1.msra.mxu0 0.0
    %1507 = vmatprep.subr.mxu0 0.0
    %1508 = vmatpush1.msra.mxu0 0.0
    %1509 = vmatprep.subr.mxu0 0.0
    %1510 = vmatpush1.msra.mxu0 0.0
    %1511 = vmatprep.subr.mxu0 0.0
    %1512 = vmatpush1.msra.mxu0 0.0
    %1513 = vmatprep.subr.mxu0 0.0
    %1514 = vmatpush1.msra.mxu0 0.0
    %1515 = vmatprep.subr.mxu0 0.0
    %1516 = vmatpush1.msra.mxu0 0.0
    %1517 = vmatprep.subr.mxu0 0.0
    %1518 = vmatpush1.msra.mxu0 0.0
    %1519 = vmatprep.subr.mxu0 0.0
    %1520 = vmatpush1.msra.mxu0 0.0
    %1521 = vmatprep.subr.mxu0 0.0
    %1522 = vmatpush1.msra.mxu0 0.0
    %1523 = vmatprep.subr.mxu0 0.0
    %1524 = vmatpush1.msra.mxu0 0.0
    %1525 = vmatprep.subr.mxu0 0.0
    %1526 = vmatpush1.msra.mxu0 0.0
    %1527 = vmatprep.subr.mxu0 0.0
    %1528 = vmatpush1.msra.mxu0 0.0
    %1529 = vmatprep.subr.mxu0 0.0
    %1530 = vmatpush1.msra.mxu0 0.0
    %1531 = vmatprep.subr.mxu0 0.0
    %1532 = vmatpush1.msra.mxu0 0.0
    %1533 = vmatprep.subr.mxu0 0.0
    %1534 = vmatpush1.msra.mxu0 0.0
    %1535 = vmatprep.subr.mxu0 0.0
    %1536 = vmatpush1.msra.mxu0 0.0
    %1537 = vmatprep.subr.mxu0 0.0
    %1538 = vmatpush1.msra.mxu0 0.0
    %1539 = vmatprep.subr.mxu0 0.0
    %1540 = vmatpush1.msra.mxu0 0.0
    %1541 = vmatprep.subr.mxu0 0.0
    %1542 = vmatpush1.msra.mxu0 0.0
    %1543 = vmatprep.subr.mxu0 0.0
    %1544 = vmatpush1.msra.mxu0 0.0
    %1545 = vmatprep.subr.mxu0 0.0
    %1546 = vmatpush1.msra.mxu0 0.0
    %1547 = vmatprep.subr.mxu0 0.0
    %1548 = vmatpush1.msra.mxu0 0.0
    %1549 = vmatprep.subr.mxu0 0.0
    %1550 = vmatpush1.msra.mxu0 0.0
    %1551 = vmatprep.subr.mxu0 0.0
    %1552 = vmatpush1.msra.mxu0 0.0
    %1553 = vmatprep.subr.mxu0 0.0
    %1554 = vmatpush1.msra.mxu0 0.0
    %1555 = vmatprep.subr.mxu0 0.0
    %1556 = vmatpush1.msra.mxu0 0.0
    %1557 = vmatprep.subr.mxu0 0.0
    %1558 = vmatpush1.msra.mxu0 0.0
    %1559 = vmatprep.subr.mxu0 0.0
    %1560 = vmatpush1.msra.mxu0 0.0
    %1561 = vmatprep.subr.mxu0 0.0
    %1562 = vmatpush1.msra.mxu0 0.0
    %1563 = vmatprep.mubr.f32.mxu0 0.0
    %1564 = vmatmul.mubr.f32.gmra.mrb[0].mxu0 %v1494
    %v1565 = vpop.f32.mrb[0].mxu0
    %v1566 = vadd.f32 0.0, %v1565
    %v1567 = vpop.f32.mrb[0].mxu0
    %1568 = vmatprep.mubr.f32.mxu0 0.0
    %1569 = vmatmul.mubr.f32.gmra.mrb[0].mxu0 %v1497
    %v1570 = vpop.f32.mrb[0].mxu0
    %v1571 = vadd.f32 0.0, %v1570
    %v1572 = vpop.f32.mrb[0].mxu0
    %1573 = vdwg.mxu0
    %v1575 = vsel %vm296, %v162, 0
    %v1578 = vsel %vm296, %v163, 0
    %1580 = vmatprep.subr.mxu0 0.0
    %1581 = vmatpush1.msra.mxu0 %v935
    %1582 = vmatprep.subr.mxu0 0.0
    %1583 = vmatpush1.msra.mxu0 %v940
    %1584 = vmatprep.subr.mxu0 0.0
    %1585 = vmatpush1.msra.mxu0 0.0
    %1586 = vmatprep.subr.mxu0 0.0
    %1587 = vmatpush1.msra.mxu0 0.0
    %1588 = vmatprep.subr.mxu0 0.0
    %1589 = vmatpush1.msra.mxu0 0.0
    %1590 = vmatprep.subr.mxu0 0.0
    %1591 = vmatpush1.msra.mxu0 0.0
    %1592 = vmatprep.subr.mxu0 0.0
    %1593 = vmatpush1.msra.mxu0 0.0
    %1594 = vmatprep.subr.mxu0 0.0
    %1595 = vmatpush1.msra.mxu0 0.0
    %1596 = vmatprep.subr.mxu0 0.0
    %1597 = vmatpush1.msra.mxu0 0.0
    %1598 = vmatprep.subr.mxu0 0.0
    %1599 = vmatpush1.msra.mxu0 0.0
    %1600 = vmatprep.subr.mxu0 0.0
    %1601 = vmatpush1.msra.mxu0 0.0
    %1602 = vmatprep.subr.mxu0 0.0
    %1603 = vmatpush1.msra.mxu0 0.0
    %1604 = vmatprep.subr.mxu0 0.0
    %1605 = vmatpush1.msra.mxu0 0.0
    %1606 = vmatprep.subr.mxu0 0.0
    %1607 = vmatpush1.msra.mxu0 0.0
    %1608 = vmatprep.subr.mxu0 0.0
    %1609 = vmatpush1.msra.mxu0 0.0
    %1610 = vmatprep.subr.mxu0 0.0
    %1611 = vmatpush1.msra.mxu0 0.0
    %1612 = vmatprep.subr.mxu0 0.0
    %1613 = vmatpush1.msra.mxu0 0.0
    %1614 = vmatprep.subr.mxu0 0.0
    %1615 = vmatpush1.msra.mxu0 0.0
    %1616 = vmatprep.subr.mxu0 0.0
    %1617 = vmatpush1.msra.mxu0 0.0
    %1618 = vmatprep.subr.mxu0 0.0
    %1619 = vmatpush1.msra.mxu0 0.0
    %1620 = vmatprep.subr.mxu0 0.0
    %1621 = vmatpush1.msra.mxu0 0.0
    %1622 = vmatprep.subr.mxu0 0.0
    %1623 = vmatpush1.msra.mxu0 0.0
    %1624 = vmatprep.subr.mxu0 0.0
    %1625 = vmatpush1.msra.mxu0 0.0
    %1626 = vmatprep.subr.mxu0 0.0
    %1627 = vmatpush1.msra.mxu0 0.0
    %1628 = vmatprep.subr.mxu0 0.0
    %1629 = vmatpush1.msra.mxu0 0.0
    %1630 = vmatprep.subr.mxu0 0.0
    %1631 = vmatpush1.msra.mxu0 0.0
    %1632 = vmatprep.subr.mxu0 0.0
    %1633 = vmatpush1.msra.mxu0 0.0
    %1634 = vmatprep.subr.mxu0 0.0
    %1635 = vmatpush1.msra.mxu0 0.0
    %1636 = vmatprep.subr.mxu0 0.0
    %1637 = vmatpush1.msra.mxu0 0.0
    %1638 = vmatprep.subr.mxu0 0.0
    %1639 = vmatpush1.msra.mxu0 0.0
    %1640 = vmatprep.subr.mxu0 0.0
    %1641 = vmatpush1.msra.mxu0 0.0
    %1642 = vmatprep.subr.mxu0 0.0
    %1643 = vmatpush1.msra.mxu0 0.0
    %1644 = vmatprep.mubr.f32.mxu0 0.0
    %1645 = vmatmul.mubr.f32.gmra.mrb[0].mxu0 %v1575
    %v1646 = vpop.f32.mrb[0].mxu0
    %v1647 = vadd.f32 0.0, %v1646
    %v1648 = vpop.f32.mrb[0].mxu0
    %1649 = vmatprep.mubr.f32.mxu0 0.0
    %1650 = vmatmul.mubr.f32.gmra.mrb[0].mxu0 %v1578
    %v1651 = vpop.f32.mrb[0].mxu0
    %v1652 = vadd.f32 0.0, %v1651
    %v1653 = vpop.f32.mrb[0].mxu0
    %1654 = vdwg.mxu0
    %v1656 = vsel %vm296, %v164, 0
    %v1659 = vsel %vm296, %v165, 0
    %1661 = vmatprep.subr.mxu0 0.0
    %1662 = vmatpush1.msra.mxu0 %v1048
    %1663 = vmatprep.subr.mxu0 0.0
    %1664 = vmatpush1.msra.mxu0 %v1053
    %1665 = vmatprep.subr.mxu0 0.0
    %1666 = vmatpush1.msra.mxu0 0.0
    %1667 = vmatprep.subr.mxu0 0.0
    %1668 = vmatpush1.msra.mxu0 0.0
    %1669 = vmatprep.subr.mxu0 0.0
    %1670 = vmatpush1.msra.mxu0 0.0
    %1671 = vmatprep.subr.mxu0 0.0
    %1672 = vmatpush1.msra.mxu0 0.0
    %1673 = vmatprep.subr.mxu0 0.0
    %1674 = vmatpush1.msra.mxu0 0.0
    %1675 = vmatprep.subr.mxu0 0.0
    %1676 = vmatpush1.msra.mxu0 0.0
    %1677 = vmatprep.subr.mxu0 0.0
    %1678 = vmatpush1.msra.mxu0 0.0
    %1679 = vmatprep.subr.mxu0 0.0
    %1680 = vmatpush1.msra.mxu0 0.0
    %1681 = vmatprep.subr.mxu0 0.0
    %1682 = vmatpush1.msra.mxu0 0.0
    %1683 = vmatprep.subr.mxu0 0.0
    %1684 = vmatpush1.msra.mxu0 0.0
    %1685 = vmatprep.subr.mxu0 0.0
    %1686 = vmatpush1.msra.mxu0 0.0
    %1687 = vmatprep.subr.mxu0 0.0
    %1688 = vmatpush1.msra.mxu0 0.0
    %1689 = vmatprep.subr.mxu0 0.0
    %1690 = vmatpush1.msra.mxu0 0.0
    %1691 = vmatprep.subr.mxu0 0.0
    %1692 = vmatpush1.msra.mxu0 0.0
    %1693 = vmatprep.subr.mxu0 0.0
    %1694 = vmatpush1.msra.mxu0 0.0
    %1695 = vmatprep.subr.mxu0 0.0
    %1696 = vmatpush1.msra.mxu0 0.0
    %1697 = vmatprep.subr.mxu0 0.0
    %1698 = vmatpush1.msra.mxu0 0.0
    %1699 = vmatprep.subr.mxu0 0.0
    %1700 = vmatpush1.msra.mxu0 0.0
    %1701 = vmatprep.subr.mxu0 0.0
    %1702 = vmatpush1.msra.mxu0 0.0
    %1703 = vmatprep.subr.mxu0 0.0
    %1704 = vmatpush1.msra.mxu0 0.0
    %1705 = vmatprep.subr.mxu0 0.0
    %1706 = vmatpush1.msra.mxu0 0.0
    %1707 = vmatprep.subr.mxu0 0.0
    %1708 = vmatpush1.msra.mxu0 0.0
    %1709 = vmatprep.subr.mxu0 0.0
    %1710 = vmatpush1.msra.mxu0 0.0
    %1711 = vmatprep.subr.mxu0 0.0
    %1712 = vmatpush1.msra.mxu0 0.0
    %1713 = vmatprep.subr.mxu0 0.0
    %1714 = vmatpush1.msra.mxu0 0.0
    %1715 = vmatprep.subr.mxu0 0.0
    %1716 = vmatpush1.msra.mxu0 0.0
    %1717 = vmatprep.subr.mxu0 0.0
    %1718 = vmatpush1.msra.mxu0 0.0
    %1719 = vmatprep.subr.mxu0 0.0
    %1720 = vmatpush1.msra.mxu0 0.0
    %1721 = vmatprep.subr.mxu0 0.0
    %1722 = vmatpush1.msra.mxu0 0.0
    %1723 = vmatprep.subr.mxu0 0.0
    %1724 = vmatpush1.msra.mxu0 0.0
    %1725 = vmatprep.mubr.f32.mxu0 0.0
    %1726 = vmatmul.mubr.f32.gmra.mrb[0].mxu0 %v1656
    %v1727 = vpop.f32.mrb[0].mxu0
    %v1728 = vadd.f32 0.0, %v1727
    %v1729 = vpop.f32.mrb[0].mxu0
    %1730 = vmatprep.mubr.f32.mxu0 0.0
    %1731 = vmatmul.mubr.f32.gmra.mrb[0].mxu0 %v1659
    %v1732 = vpop.f32.mrb[0].mxu0
    %v1733 = vadd.f32 0.0, %v1732
    %v1734 = vpop.f32.mrb[0].mxu0
    %1735 = vdwg.mxu0
    %v1737 = vsel %vm296, %v166, 0
    %v1740 = vsel %vm296, %v167, 0
    %1742 = vmatprep.subr.mxu0 0.0
    %1743 = vmatpush1.msra.mxu0 %v1161
    %1744 = vmatprep.subr.mxu0 0.0
    %1745 = vmatpush1.msra.mxu0 %v1166
    %1746 = vmatprep.subr.mxu0 0.0
    %1747 = vmatpush1.msra.mxu0 0.0
    %1748 = vmatprep.subr.mxu0 0.0
    %1749 = vmatpush1.msra.mxu0 0.0
    %1750 = vmatprep.subr.mxu0 0.0
    %1751 = vmatpush1.msra.mxu0 0.0
    %1752 = vmatprep.subr.mxu0 0.0
    %1753 = vmatpush1.msra.mxu0 0.0
    %1754 = vmatprep.subr.mxu0 0.0
    %1755 = vmatpush1.msra.mxu0 0.0
    %1756 = vmatprep.subr.mxu0 0.0
    %1757 = vmatpush1.msra.mxu0 0.0
    %1758 = vmatprep.subr.mxu0 0.0
    %1759 = vmatpush1.msra.mxu0 0.0
    %1760 = vmatprep.subr.mxu0 0.0
    %1761 = vmatpush1.msra.mxu0 0.0
    %1762 = vmatprep.subr.mxu0 0.0
    %1763 = vmatpush1.msra.mxu0 0.0
    %1764 = vmatprep.subr.mxu0 0.0
    %1765 = vmatpush1.msra.mxu0 0.0
    %1766 = vmatprep.subr.mxu0 0.0
    %1767 = vmatpush1.msra.mxu0 0.0
    %1768 = vmatprep.subr.mxu0 0.0
    %1769 = vmatpush1.msra.mxu0 0.0
    %1770 = vmatprep.subr.mxu0 0.0
    %1771 = vmatpush1.msra.mxu0 0.0
    %1772 = vmatprep.subr.mxu0 0.0
    %1773 = vmatpush1.msra.mxu0 0.0
    %1774 = vmatprep.subr.mxu0 0.0
    %1775 = vmatpush1.msra.mxu0 0.0
    %1776 = vmatprep.subr.mxu0 0.0
    %1777 = vmatpush1.msra.mxu0 0.0
    %1778 = vmatprep.subr.mxu0 0.0
    %1779 = vmatpush1.msra.mxu0 0.0
    %1780 = vmatprep.subr.mxu0 0.0
    %1781 = vmatpush1.msra.mxu0 0.0
    %1782 = vmatprep.subr.mxu0 0.0
    %1783 = vmatpush1.msra.mxu0 0.0
    %1784 = vmatprep.subr.mxu0 0.0
    %1785 = vmatpush1.msra.mxu0 0.0
    %1786 = vmatprep.subr.mxu0 0.0
    %1787 = vmatpush1.msra.mxu0 0.0
    %1788 = vmatprep.subr.mxu0 0.0
    %1789 = vmatpush1.msra.mxu0 0.0
    %1790 = vmatprep.subr.mxu0 0.0
    %1791 = vmatpush1.msra.mxu0 0.0
    %1792 = vmatprep.subr.mxu0 0.0
    %1793 = vmatpush1.msra.mxu0 0.0
    %1794 = vmatprep.subr.mxu0 0.0
    %1795 = vmatpush1.msra.mxu0 0.0
    %1796 = vmatprep.subr.mxu0 0.0
    %1797 = vmatpush1.msra.mxu0 0.0
    %1798 = vmatprep.subr.mxu0 0.0
    %1799 = vmatpush1.msra.mxu0 0.0
    %1800 = vmatprep.subr.mxu0 0.0
    %1801 = vmatpush1.msra.mxu0 0.0
    %1802 = vmatprep.subr.mxu0 0.0
    %1803 = vmatpush1.msra.mxu0 0.0
    %1804 = vmatprep.subr.mxu0 0.0
    %1805 = vmatpush1.msra.mxu0 0.0
    %1806 = vmatprep.mubr.f32.mxu0 0.0
    %1807 = vmatmul.mubr.f32.gmra.mrb[0].mxu0 %v1737
    %v1808 = vpop.f32.mrb[0].mxu0
    %v1809 = vadd.f32 0.0, %v1808
    %v1810 = vpop.f32.mrb[0].mxu0
    %1811 = vmatprep.mubr.f32.mxu0 0.0
    %1812 = vmatmul.mubr.f32.gmra.mrb[0].mxu0 %v1740
    %v1813 = vpop.f32.mrb[0].mxu0
    %v1814 = vadd.f32 0.0, %v1813
    %v1815 = vpop.f32.mrb[0].mxu0
    %1816 = vdwg.mxu0
    %v1817 = vadd.f32 %v1242, 1e-06
    %v1818 = vadd.f32 %v1247, 1e-06
    %v1819 = vadd.f32 %v1323, 1e-06
    %v1820 = vadd.f32 %v1328, 1e-06
    %v1821 = vadd.f32 %v1404, 1e-06
    %v1822 = vadd.f32 %v1409, 1e-06
    %v1823 = vadd.f32 %v1485, 1e-06
    %v1824 = vadd.f32 %v1490, 1e-06
    %v1825 = vadd.f32 %v1566, 1e-06
    %v1826 = vadd.f32 %v1571, 1e-06
    %v1827 = vadd.f32 %v1647, 1e-06
    %v1828 = vadd.f32 %v1652, 1e-06
    %v1829 = vadd.f32 %v1728, 1e-06
    %v1830 = vadd.f32 %v1733, 1e-06
    %v1831 = vadd.f32 %v1809, 1e-06
    %v1832 = vadd.f32 %v1814, 1e-06
    %v1833 = vrcp.pop %v1817
    %v1834 = vmul.f32 1.0, %v1833
    %v1835 = vrcp.pop %v1818
    %v1836 = vmul.f32 1.0, %v1835
    %v1837 = vrcp.pop %v1819
    %v1838 = vmul.f32 1.0, %v1837
    %v1839 = vrcp.pop %v1820
    %v1840 = vmul.f32 1.0, %v1839
    %v1841 = vrcp.pop %v1821
    %v1842 = vmul.f32 1.0, %v1841
    %v1843 = vrcp.pop %v1822
    %v1844 = vmul.f32 1.0, %v1843
    %v1845 = vrcp.pop %v1823
    %v1846 = vmul.f32 1.0, %v1845
    %v1847 = vrcp.pop %v1824
    %v1848 = vmul.f32 1.0, %v1847
    %v1849 = vrcp.pop %v1825
    %v1850 = vmul.f32 1.0, %v1849
    %v1851 = vrcp.pop %v1826
    %v1852 = vmul.f32 1.0, %v1851
    %v1853 = vrcp.pop %v1827
    %v1854 = vmul.f32 1.0, %v1853
    %v1855 = vrcp.pop %v1828
    %v1856 = vmul.f32 1.0, %v1855
    %v1857 = vrcp.pop %v1829
    %v1858 = vmul.f32 1.0, %v1857
    %v1859 = vrcp.pop %v1830
    %v1860 = vmul.f32 1.0, %v1859
    %v1861 = vrcp.pop %v1831
    %v1862 = vmul.f32 1.0, %v1861
    %v1863 = vrcp.pop %v1832
    %v1864 = vmul.f32 1.0, %v1863
    %1866 = vset.pattern.permute.xlu0 16
    %1867 = vperm.xlu0 %1866, %v1834
    %v1868 = vpop.permute.xlu0 %1867
    %1871 = vset.pattern.permute.xlu0 16
    %1872 = vperm.xlu0 %1871, %v1836
    %v1873 = vpop.permute.xlu0 %1872
    %1876 = vset.pattern.permute.xlu0 16
    %1877 = vperm.xlu0 %1876, %v1838
    %v1878 = vpop.permute.xlu0 %1877
    %1881 = vset.pattern.permute.xlu0 16
    %1882 = vperm.xlu0 %1881, %v1840
    %v1883 = vpop.permute.xlu0 %1882
    %1886 = vset.pattern.permute.xlu0 16
    %1887 = vperm.xlu0 %1886, %v1842
    %v1888 = vpop.permute.xlu0 %1887
    %1891 = vset.pattern.permute.xlu0 16
    %1892 = vperm.xlu0 %1891, %v1844
    %v1893 = vpop.permute.xlu0 %1892
    %1896 = vset.pattern.permute.xlu0 16
    %1897 = vperm.xlu0 %1896, %v1846
    %v1898 = vpop.permute.xlu0 %1897
    %1901 = vset.pattern.permute.xlu0 16
    %1902 = vperm.xlu0 %1901, %v1848
    %v1903 = vpop.permute.xlu0 %1902
    %1906 = vset.pattern.permute.xlu0 16
    %1907 = vperm.xlu0 %1906, %v1850
    %v1908 = vpop.permute.xlu0 %1907
    %1911 = vset.pattern.permute.xlu0 16
    %1912 = vperm.xlu0 %1911, %v1852
    %v1913 = vpop.permute.xlu0 %1912
    %1916 = vset.pattern.permute.xlu0 16
    %1917 = vperm.xlu0 %1916, %v1854
    %v1918 = vpop.permute.xlu0 %1917
    %1921 = vset.pattern.permute.xlu0 16
    %1922 = vperm.xlu0 %1921, %v1856
    %v1923 = vpop.permute.xlu0 %1922
    %1926 = vset.pattern.permute.xlu0 16
    %1927 = vperm.xlu0 %1926, %v1858
    %v1928 = vpop.permute.xlu0 %1927
    %1931 = vset.pattern.permute.xlu0 16
    %1932 = vperm.xlu0 %1931, %v1860
    %v1933 = vpop.permute.xlu0 %1932
    %1936 = vset.pattern.permute.xlu0 16
    %1937 = vperm.xlu0 %1936, %v1862
    %v1938 = vpop.permute.xlu0 %1937
    %1941 = vset.pattern.permute.xlu0 16
    %1942 = vperm.xlu0 %1941, %v1864
    %v1943 = vpop.permute.xlu0 %1942
    %v1945 = vmul.f32 %v1242, %v1868
    %v1946 = vmul.f32 %v1247, %v1873
    %v1947 = vmul.f32 %v1323, %v1878
    %v1948 = vmul.f32 %v1328, %v1883
    %v1949 = vmul.f32 %v1404, %v1888
    %v1950 = vmul.f32 %v1409, %v1893
    %v1951 = vmul.f32 %v1485, %v1898
    %v1952 = vmul.f32 %v1490, %v1903
    %v1953 = vmul.f32 %v1566, %v1908
    %v1954 = vmul.f32 %v1571, %v1913
    %v1955 = vmul.f32 %v1647, %v1918
    %v1956 = vmul.f32 %v1652, %v1923
    %v1957 = vmul.f32 %v1728, %v1928
    %v1958 = vmul.f32 %v1733, %v1933
    %v1959 = vmul.f32 %v1809, %v1938
    %v1960 = vmul.f32 %v1814, %v1943
    %1961 = vst.msk [vmem:[#allocation8] sm:$0xff] %vm296, %v1945
    %1962 = vst.msk [vmem:[#allocation8 + $0x8] sm:$0xff] %vm296, %v1946
    %1963 = vst.msk [vmem:[#allocation8 + $0x10] sm:$0xff] %vm296, %v1947
    %1964 = vst.msk [vmem:[#allocation8 + $0x18] sm:$0xff] %vm296, %v1948
    %1965 = vst.msk [vmem:[#allocation8 + $0x20] sm:$0xff] %vm296, %v1949
    %1966 = vst.msk [vmem:[#allocation8 + $0x28] sm:$0xff] %vm296, %v1950
    %1967 = vst.msk [vmem:[#allocation8 + $0x30] sm:$0xff] %vm296, %v1951
    %1968 = vst.msk [vmem:[#allocation8 + $0x38] sm:$0xff] %vm296, %v1952
    %1969 = vst.msk [vmem:[#allocation8 + $0x40] sm:$0xff] %vm296, %v1953
    %1970 = vst.msk [vmem:[#allocation8 + $0x48] sm:$0xff] %vm296, %v1954
    %1971 = vst.msk [vmem:[#allocation8 + $0x50] sm:$0xff] %vm296, %v1955
    %1972 = vst.msk [vmem:[#allocation8 + $0x58] sm:$0xff] %vm296, %v1956
    %1973 = vst.msk [vmem:[#allocation8 + $0x60] sm:$0xff] %vm296, %v1957
    %1974 = vst.msk [vmem:[#allocation8 + $0x68] sm:$0xff] %vm296, %v1958
    %1975 = vst.msk [vmem:[#allocation8 + $0x70] sm:$0xff] %vm296, %v1959
    %1976 = vst.msk [vmem:[#allocation8 + $0x78] sm:$0xff] %vm296, %v1960
    // Predicated region
    $region26: #{tpu_custom_call.1} parent=1 // pred_check
      _
    $region27: #{tpu_custom_call.1} parent=1 // pred_check_branch
      %1978 = sbr.rel (0) target = $region29
    $region28: #{tpu_custom_call.1} parent=1 // pred_region
      %s1980 = ssub.s32 2048, 2048
      %1981 = vsyncadd [#allocation4], %s1980
      %s1982 = sshll.u32 [#allocation8], 4
      %s1983 = int_to_ptr.vmem [resolvable:$true] %s1982
      %1988 = dma.vmem_to_hbm [thread:$0]  %s1983, 2048, %s3, [#allocation4], 128, 128, 8
    $region29: #{tpu_custom_call.1} parent=1 // pred_fallthru
      _
    // Predicated region
    $region30: #{tpu_custom_call.1} parent=1 // pred_check
      _
    $region31: #{tpu_custom_call.1} parent=1 // pred_check_branch
      %1990 = sbr.rel (0) target = $region33
    $region32: #{tpu_custom_call.1} parent=1 // pred_region
      %1991 = dma.done [#allocation4], 2048
    $region33: #{tpu_custom_call.1} parent=1 // pred_fallthru
      _
    %1992 = vsyncpa [#allocation3], 1
    %1993 = vsyncpa [#allocation6], 1
    %1994 = vsyncpa [#allocation4], 1

</llo_original>
